<compile_context>
chip_gen: v7x
topology: tpu7x:2x2x1
jax: 0.10.0
libtpu: 0.0.40
codegen_flags: <defaults>
</compile_context>

<pallas_src>
import functools

import jax
import jax.numpy as jnp
from jax.experimental import pallas as pl
from jax.experimental.pallas import tpu as pltpu

INPUT_DIM = 6
HIDDEN_DIM = 64
OUTPUT_DIM = 1
NUM_LAYERS = 2
OUT_PAD = 128  # lane-dense output block; wrapper slices column 0


def _round_up(x, m):
    return ((x + m - 1) // m) * m


def lstm_kernel(x_ref,      # (T*TB, D)   time-major, flattened, f32
                wih0_ref,   # (D, 4H)     bf16, g-cols pre-scaled by 2
                whh0_ref,   # (H, 4H)     bf16, g-cols pre-scaled by 2
                b0_ref,     # (1, 4H)     f32,  g-cols pre-scaled by 2
                w1_ref,     # (2H, 4H)    bf16 = vstack(W_ih1, W_hh1), g-scaled
                b1_ref,     # (1, 4H)     f32,  g-scaled
                fcw_ref,    # (1, H)      f32
                fcb_ref,    # (1, 1)      f32
                out_ref,    # (TB, OUT_PAD)
                xp_ref,     # VMEM scratch (T*TB, 4H) f32
                *, seq_len, batch_tile):
    T = seq_len
    TB = batch_tile
    H = whh0_ref.shape[0]

    # --- Layer-0 input projection for ALL timesteps: one bf16 MXU matmul,
    #     b0 folded in, staged in VMEM scratch (off the recurrent critical path).
    xp_ref[...] = (jnp.dot(x_ref[...].astype(jnp.bfloat16), wih0_ref[...],
                           preferred_element_type=jnp.float32)
                   + b0_ref[...])

    whh0 = whh0_ref[...]                                   # bf16 (H, 4H)
    w1 = w1_ref[...]                                       # bf16 (2H, 4H)
    b1b = jnp.broadcast_to(b1_ref[...], (TB, 4 * H))       # hoisted broadcast

    def cell(z, c):
        # One full-width (TB, 4H) sigmoid on the EUP; the g-gate pre-activation
        # was scaled by 2 in the wrapper, so tanh(z_g) = 2*sigmoid(2*z_g) - 1.
        zs = jax.nn.sigmoid(z)
        i = zs[:, 0 * H:1 * H]
        f = zs[:, 1 * H:2 * H]
        g = 2.0 * zs[:, 2 * H:3 * H] - 1.0
        o = zs[:, 3 * H:4 * H]
        c_new = f * c + i * g
        h_new = o * jnp.tanh(c_new)
        return h_new, c_new

    def step(xp_t, h0, c0, h1, c1):
        # Layer 0: only h0 @ W_hh0 remains on the recurrent path.
        z0 = xp_t + jnp.dot(h0.astype(jnp.bfloat16), whh0,
                            preferred_element_type=jnp.float32)
        h0, c0 = cell(z0, c0)
        # Layer 1: fused [h0|h1] @ vstack(W_ih1, W_hh1)  (one K=128 matmul).
        hcat = jnp.concatenate([h0, h1], axis=1).astype(jnp.bfloat16)
        z1 = jnp.dot(hcat, w1, preferred_element_type=jnp.float32) + b1b
        h1, c1 = cell(z1, c1)
        return h0, c0, h1, c1

    h0 = jnp.zeros((TB, H), jnp.float32)
    c0 = jnp.zeros((TB, H), jnp.float32)
    h1 = jnp.zeros((TB, H), jnp.float32)
    c1 = jnp.zeros((TB, H), jnp.float32)

    if T <= 32:
        # Full unroll: gives the LLO scheduler maximal cross-step overlap.
        for t in range(T):
            xp_t = xp_ref[t * TB:(t + 1) * TB, :]          # static, aligned slice
            h0, c0, h1, c1 = step(xp_t, h0, c0, h1, c1)
    else:
        # Long sequences: bounded code size, aligned dynamic slices.
        def body(t, carry):
            h0, c0, h1, c1 = carry
            start = pl.multiple_of(t * TB, TB)
            xp_t = xp_ref[pl.ds(start, TB), :]
            return step(xp_t, h0, c0, h1, c1)
        h0, c0, h1, c1 = jax.lax.fori_loop(0, T, body, (h0, c0, h1, c1))

    # fc (H -> 1) as a VPU multiply + lane reduction (avoids an N=1 MXU pass),
    # broadcast across 128 lanes so the final store is an unmasked full vst.
    logits = jnp.sum(h1 * fcw_ref[...], axis=-1, keepdims=True) + fcb_ref[...]
    sig = jax.nn.sigmoid(logits)
    out_ref[...] = jnp.broadcast_to(sig, out_ref.shape).astype(out_ref.dtype)


def stock_price_lstm_forward(x, params, *, batch_tile=None):
    """x: (B, T, input_dim) batch-first, like the PyTorch module."""
    B, T, D = x.shape
    H = params["whh0"].shape[0]

    # --- batch tiling -----------------------------------------------------
    B8 = _round_up(B, 8)
    if batch_tile is None:
        if B8 >= 128:
            # >= 2 parallel tiles so v7x's two TensorCores both get work,
            # without shrinking tiles below 64 rows (v5e/v6e just loop).
            batch_tile = min(256, _round_up(pl.cdiv(B8, 2), 8))
        else:
            batch_tile = B8                      # one fat tile for small B
    B_pad = _round_up(max(B8, batch_tile), batch_tile)
    num_tiles = B_pad // batch_tile

    x_pad = jnp.zeros((B_pad, T, D), jnp.float32).at[:B].set(x.astype(jnp.float32))
    # Per-tile time-major layout: (num_tiles, T*TB, D); the kernel sees a flat
    # 2-D block and does the whole input projection as one matmul.
    x_tiles = (x_pad.reshape(num_tiles, batch_tile, T, D)
                    .transpose(0, 2, 1, 3)
                    .reshape(num_tiles, T * batch_tile, D))

    # --- weight prep: fold tanh = 2*sigmoid(2x)-1 into g-gate columns,
    #     fuse layer-1 weights, cast MXU operands to bf16 -------------------
    def scale_g(w):
        return w.at[..., 2 * H:3 * H].multiply(2.0)

    wih0 = scale_g(params["wih0"]).astype(jnp.bfloat16)
    whh0 = scale_g(params["whh0"]).astype(jnp.bfloat16)
    b0 = scale_g(params["b0"]).astype(jnp.float32)
    w1cat = scale_g(jnp.concatenate([params["wih1"], params["whh1"]], axis=0)
                    ).astype(jnp.bfloat16)
    b1 = scale_g(params["b1"]).astype(jnp.float32)
    fcw = params["fcw"].reshape(1, H).astype(jnp.float32)    # (H,1) -> (1,H)
    fcb = params["fcb"].reshape(1, 1).astype(jnp.float32)

    weight_args = (wih0, whh0, b0, w1cat, b1, fcw, fcb)

    def rep_spec(a):
        nd = a.ndim
        return pl.BlockSpec(a.shape, lambda b: (0,) * nd)    # resident, no re-DMA

    x_spec = pl.BlockSpec((None, T * batch_tile, D), lambda b: (b, 0, 0))

    kernel = functools.partial(lstm_kernel, seq_len=T, batch_tile=batch_tile)

    # NOTE: xp scratch is T*TB*4H*4 bytes; at the shipped sizes this is far
    # below any scoped-VMEM limit.  For very long T on v5e/v7x, raise
    # vmem_limit_bytes or chunk the projection in time.
    out_pad = pl.pallas_call(
        kernel,
        out_shape=jax.ShapeDtypeStruct((B_pad, OUT_PAD), jnp.float32),
        grid=(num_tiles,),
        in_specs=[x_spec] + [rep_spec(a) for a in weight_args],
        out_specs=pl.BlockSpec((batch_tile, OUT_PAD), lambda b: (b, 0)),
        scratch_shapes=[pltpu.VMEM((T * batch_tile, 4 * H), jnp.float32)],
        compiler_params=pltpu.CompilerParams(
            dimension_semantics=("parallel",)),
    )(x_tiles, *weight_args)

    return out_pad[:B, :OUTPUT_DIM]


def init_params(key, input_dim=INPUT_DIM, hidden=HIDDEN_DIM, output_dim=OUTPUT_DIM):
    """Deterministic init mimicking PyTorch defaults: U(-1/sqrt(H), 1/sqrt(H))."""
    ks = jax.random.split(key, 12)
    s = 1.0 / jnp.sqrt(hidden)

    def u(k, shape):
        return jax.random.uniform(k, shape, jnp.float32, -s, s)

    # Layer 0 (input_dim -> hidden). Weights stored transposed: (in, 4H).
    wih0 = u(ks[0], (input_dim, 4 * hidden))
    whh0 = u(ks[1], (hidden, 4 * hidden))
    b0 = u(ks[2], (1, 4 * hidden)) + u(ks[3], (1, 4 * hidden))   # b_ih + b_hh

    # Layer 1 (hidden -> hidden).
    wih1 = u(ks[4], (hidden, 4 * hidden))
    whh1 = u(ks[5], (hidden, 4 * hidden))
    b1 = u(ks[6], (1, 4 * hidden)) + u(ks[7], (1, 4 * hidden))

    # fc: Linear(hidden, output_dim), stored transposed (H, out).
    sf = 1.0 / jnp.sqrt(hidden)
    fcw = jax.random.uniform(ks[8], (hidden, output_dim), jnp.float32, -sf, sf)
    fcb = jax.random.uniform(ks[9], (1, output_dim), jnp.float32, -sf, sf)

    return dict(wih0=wih0, whh0=whh0, b0=b0,
                wih1=wih1, whh1=whh1, b1=b1,
                fcw=fcw, fcb=fcb)


def reference_forward(x, params):
    """Pure-JAX f32 reference matching torch.nn.LSTM(batch_first) + Linear + Sigmoid."""
    B, T, _ = x.shape
    H = params["whh0"].shape[0]

    def cell(x_t, h, c, wih, whh, b):
        z = x_t @ wih + h @ whh + b
        i = jax.nn.sigmoid(z[:, 0 * H:1 * H])
        f = jax.nn.sigmoid(z[:, 1 * H:2 * H])
        g = jnp.tanh(z[:, 2 * H:3 * H])
        o = jax.nn.sigmoid(z[:, 3 * H:4 * H])
        c = f * c + i * g
        h = o * jnp.tanh(c)
        return h, c

    h0 = c0 = h1 = c1 = jnp.zeros((B, H), jnp.float32)
    for t in range(T):
        h0, c0 = cell(x[:, t, :], h0, c0, params["wih0"], params["whh0"], params["b0"])
        h1, c1 = cell(h0, h1, c1, params["wih1"], params["whh1"], params["b1"])
    return jax.nn.sigmoid(h1 @ params["fcw"] + params["fcb"])


if __name__ == "__main__":
    key = jax.random.PRNGKey(0)
    k_x, k_p = jax.random.split(key)

    B, T = 4, 8
    x = jax.random.normal(k_x, (B, T, INPUT_DIM), jnp.float32)
    params = init_params(k_p)

    out = stock_price_lstm_forward(x, params)
    out = jax.block_until_ready(out)

    ref = reference_forward(x, params)
    assert out.shape == (B, OUTPUT_DIM)
    # bf16 MXU operands (f32 accumulation / gate math) => looser tolerance.
    err = float(jnp.max(jnp.abs(out - ref)))
    assert err < 2e-2, (err, out, ref)

    print("KERNEL_OK")
</pallas_src>

<mosaic_0001>
module attributes {stable_mosaic.version = 11 : i64} {
  func.func @lstm_kernel(%arg0: i32, %arg1: memref<1x64x6xf32, #tpu.memory_space<vmem>>, %arg2: memref<6x256xbf16, #tpu.memory_space<vmem>>, %arg3: memref<64x256xbf16, #tpu.memory_space<vmem>>, %arg4: memref<1x256xf32, #tpu.memory_space<vmem>>, %arg5: memref<128x256xbf16, #tpu.memory_space<vmem>>, %arg6: memref<1x256xf32, #tpu.memory_space<vmem>>, %arg7: memref<1x64xf32, #tpu.memory_space<vmem>>, %arg8: memref<1x1xf32, #tpu.memory_space<vmem>>, %arg9: memref<8x128xf32, #tpu.memory_space<vmem>>, %arg10: memref<64x256xf32, #tpu.memory_space<vmem>>) attributes {dimension_semantics = [#tpu.dimension_semantics<parallel>], iteration_bounds = array<i64: 1>, scalar_prefetch = 0 : i64, scratch_operands = 1 : i64, tpu.core_type = #tpu.core_type<tc>, window_params = [{transform_indices = @transform_0, window_bounds = array<i64: 1, 64, 6>}, {pipeline_mode = #tpu.pipeline_mode<synchronous>, transform_indices = @transform_1, window_bounds = array<i64: 6, 256>}, {pipeline_mode = #tpu.pipeline_mode<synchronous>, transform_indices = @transform_2, window_bounds = array<i64: 64, 256>}, {pipeline_mode = #tpu.pipeline_mode<synchronous>, transform_indices = @transform_3, window_bounds = array<i64: 1, 256>}, {pipeline_mode = #tpu.pipeline_mode<synchronous>, transform_indices = @transform_4, window_bounds = array<i64: 128, 256>}, {pipeline_mode = #tpu.pipeline_mode<synchronous>, transform_indices = @transform_5, window_bounds = array<i64: 1, 256>}, {pipeline_mode = #tpu.pipeline_mode<synchronous>, transform_indices = @transform_6, window_bounds = array<i64: 1, 64>}, {pipeline_mode = #tpu.pipeline_mode<synchronous>, transform_indices = @transform_7, window_bounds = array<i64: 1, 1>}, {transform_indices = @transform_8, window_bounds = array<i64: 8, 128>}]} {
    %c0 = arith.constant 0 : index
    %c0_0 = arith.constant 0 : index
    %c0_1 = arith.constant 0 : index
    %0 = vector.load %arg1[%c0, %c0_0, %c0_1] : memref<1x64x6xf32, #tpu.memory_space<vmem>>, vector<1x64x6xf32>
    %1 = vector.shape_cast %0 : vector<1x64x6xf32> to vector<64x6xf32>
    %2 = arith.truncf %1 : vector<64x6xf32> to vector<64x6xbf16>
    %c0_2 = arith.constant 0 : index
    %c0_3 = arith.constant 0 : index
    %3 = vector.load %arg2[%c0_2, %c0_3] : memref<6x256xbf16, #tpu.memory_space<vmem>>, vector<6x256xbf16>
    %cst = arith.constant dense<0.000000e+00> : vector<64x256xf32>
    %4 = tpu.matmul %2, %3, %cst {dimension_numbers = #tpu.dot_dimension_numbers<[1], [0], [0], [1], [0, 0, 1, 1], [], []>} : vector<64x6xbf16>, vector<6x256xbf16>, vector<64x256xf32> -> vector<64x256xf32>
    %c0_4 = arith.constant 0 : index
    %c0_5 = arith.constant 0 : index
    %5 = vector.load %arg4[%c0_4, %c0_5] : memref<1x256xf32, #tpu.memory_space<vmem>>, vector<1x256xf32>
    %6 = vector.broadcast %5 : vector<1x256xf32> to vector<64x256xf32>
    %7 = arith.addf %4, %6 : vector<64x256xf32>
    %c0_6 = arith.constant 0 : index
    %c0_7 = arith.constant 0 : index
    %8 = vector.load %arg10[%c0_6, %c0_7] : memref<64x256xf32, #tpu.memory_space<vmem>>, vector<64x256xf32>
    tpu.vector_store %arg10[%c0_6, %c0_7], %7 {strides = array<i32>} : memref<64x256xf32, #tpu.memory_space<vmem>>, vector<64x256xf32>,
    %c0_8 = arith.constant 0 : index
    %c0_9 = arith.constant 0 : index
    %9 = vector.load %arg3[%c0_8, %c0_9] : memref<64x256xbf16, #tpu.memory_space<vmem>>, vector<64x256xbf16>
    %c0_10 = arith.constant 0 : index
    %c0_11 = arith.constant 0 : index
    %10 = vector.load %arg5[%c0_10, %c0_11] : memref<128x256xbf16, #tpu.memory_space<vmem>>, vector<128x256xbf16>
    %c0_12 = arith.constant 0 : index
    %c0_13 = arith.constant 0 : index
    %11 = vector.load %arg6[%c0_12, %c0_13] : memref<1x256xf32, #tpu.memory_space<vmem>>, vector<1x256xf32>
    %12 = vector.shape_cast %11 : vector<1x256xf32> to vector<1x256xf32>
    %13 = vector.broadcast %12 : vector<1x256xf32> to vector<8x256xf32>
    %cst_14 = arith.constant 0.000000e+00 : f32
    %14 = vector.broadcast %cst_14 : f32 to vector<8x64xf32>
    %cst_15 = arith.constant 0.000000e+00 : f32
    %15 = vector.broadcast %cst_15 : f32 to vector<8x64xf32>
    %cst_16 = arith.constant 0.000000e+00 : f32
    %16 = vector.broadcast %cst_16 : f32 to vector<8x64xf32>
    %cst_17 = arith.constant 0.000000e+00 : f32
    %17 = vector.broadcast %cst_17 : f32 to vector<8x64xf32>
    %c0_18 = arith.constant 0 : index
    %c0_19 = arith.constant 0 : index
    %18 = vector.load %arg10[%c0_18, %c0_19] : memref<64x256xf32, #tpu.memory_space<vmem>>, vector<8x256xf32>
    %19 = arith.truncf %14 : vector<8x64xf32> to vector<8x64xbf16>
    %cst_20 = arith.constant dense<0.000000e+00> : vector<8x256xf32>
    %20 = tpu.matmul %19, %9, %cst_20 {dimension_numbers = #tpu.dot_dimension_numbers<[1], [0], [0], [1], [0, 0, 1, 1], [], []>} : vector<8x64xbf16>, vector<64x256xbf16>, vector<8x256xf32> -> vector<8x256xf32>
    %21 = arith.addf %18, %20 : vector<8x256xf32>
    %22 = arith.negf %21 : vector<8x256xf32>
    %23 = math.exp %22 : vector<8x256xf32>
    %cst_21 = arith.constant 1.000000e+00 : f32
    %24 = vector.broadcast %cst_21 : f32 to vector<8x256xf32>
    %25 = arith.addf %24, %23 : vector<8x256xf32>
    %26 = arith.divf %24, %25 : vector<8x256xf32>
    %27 = vector.extract_strided_slice %26 {offsets = [0, 0], sizes = [8, 64], strides = [1, 1]} : vector<8x256xf32> to vector<8x64xf32>
    %28 = vector.extract_strided_slice %26 {offsets = [0, 64], sizes = [8, 64], strides = [1, 1]} : vector<8x256xf32> to vector<8x64xf32>
    %29 = vector.extract_strided_slice %26 {offsets = [0, 128], sizes = [8, 64], strides = [1, 1]} : vector<8x256xf32> to vector<8x64xf32>
    %cst_22 = arith.constant 2.000000e+00 : f32
    %30 = vector.broadcast %cst_22 : f32 to vector<8x64xf32>
    %31 = arith.mulf %30, %29 : vector<8x64xf32>
    %cst_23 = arith.constant 1.000000e+00 : f32
    %32 = vector.broadcast %cst_23 : f32 to vector<8x64xf32>
    %33 = arith.subf %31, %32 : vector<8x64xf32>
    %34 = vector.extract_strided_slice %26 {offsets = [0, 192], sizes = [8, 64], strides = [1, 1]} : vector<8x256xf32> to vector<8x64xf32>
    %35 = arith.mulf %28, %15 : vector<8x64xf32>
    %36 = arith.mulf %27, %33 : vector<8x64xf32>
    %37 = arith.addf %35, %36 : vector<8x64xf32>
    %38 = math.tanh %37 : vector<8x64xf32>
    %39 = arith.mulf %34, %38 : vector<8x64xf32>
    %40 = tpu.concatenate %39, %16 in 1 : vector<8x64xf32>, vector<8x64xf32> -> vector<8x128xf32>
    %41 = arith.truncf %40 : vector<8x128xf32> to vector<8x128xbf16>
    %cst_24 = arith.constant dense<0.000000e+00> : vector<8x256xf32>
    %42 = tpu.matmul %41, %10, %cst_24 {dimension_numbers = #tpu.dot_dimension_numbers<[1], [0], [0], [1], [0, 0, 1, 1], [], []>} : vector<8x128xbf16>, vector<128x256xbf16>, vector<8x256xf32> -> vector<8x256xf32>
    %43 = arith.addf %42, %13 : vector<8x256xf32>
    %44 = arith.negf %43 : vector<8x256xf32>
    %45 = math.exp %44 : vector<8x256xf32>
    %cst_25 = arith.constant 1.000000e+00 : f32
    %46 = vector.broadcast %cst_25 : f32 to vector<8x256xf32>
    %47 = arith.addf %46, %45 : vector<8x256xf32>
    %48 = arith.divf %46, %47 : vector<8x256xf32>
    %49 = vector.extract_strided_slice %48 {offsets = [0, 0], sizes = [8, 64], strides = [1, 1]} : vector<8x256xf32> to vector<8x64xf32>
    %50 = vector.extract_strided_slice %48 {offsets = [0, 64], sizes = [8, 64], strides = [1, 1]} : vector<8x256xf32> to vector<8x64xf32>
    %51 = vector.extract_strided_slice %48 {offsets = [0, 128], sizes = [8, 64], strides = [1, 1]} : vector<8x256xf32> to vector<8x64xf32>
    %cst_26 = arith.constant 2.000000e+00 : f32
    %52 = vector.broadcast %cst_26 : f32 to vector<8x64xf32>
    %53 = arith.mulf %52, %51 : vector<8x64xf32>
    %cst_27 = arith.constant 1.000000e+00 : f32
    %54 = vector.broadcast %cst_27 : f32 to vector<8x64xf32>
    %55 = arith.subf %53, %54 : vector<8x64xf32>
    %56 = vector.extract_strided_slice %48 {offsets = [0, 192], sizes = [8, 64], strides = [1, 1]} : vector<8x256xf32> to vector<8x64xf32>
    %57 = arith.mulf %50, %17 : vector<8x64xf32>
    %58 = arith.mulf %49, %55 : vector<8x64xf32>
    %59 = arith.addf %57, %58 : vector<8x64xf32>
    %60 = math.tanh %59 : vector<8x64xf32>
    %61 = arith.mulf %56, %60 : vector<8x64xf32>
    %c8 = arith.constant 8 : index
    %c0_28 = arith.constant 0 : index
    %62 = vector.load %arg10[%c8, %c0_28] : memref<64x256xf32, #tpu.memory_space<vmem>>, vector<8x256xf32>
    %63 = arith.truncf %39 : vector<8x64xf32> to vector<8x64xbf16>
    %cst_29 = arith.constant dense<0.000000e+00> : vector<8x256xf32>
    %64 = tpu.matmul %63, %9, %cst_29 {dimension_numbers = #tpu.dot_dimension_numbers<[1], [0], [0], [1], [0, 0, 1, 1], [], []>} : vector<8x64xbf16>, vector<64x256xbf16>, vector<8x256xf32> -> vector<8x256xf32>
    %65 = arith.addf %62, %64 : vector<8x256xf32>
    %66 = arith.negf %65 : vector<8x256xf32>
    %67 = math.exp %66 : vector<8x256xf32>
    %cst_30 = arith.constant 1.000000e+00 : f32
    %68 = vector.broadcast %cst_30 : f32 to vector<8x256xf32>
    %69 = arith.addf %68, %67 : vector<8x256xf32>
    %70 = arith.divf %68, %69 : vector<8x256xf32>
    %71 = vector.extract_strided_slice %70 {offsets = [0, 0], sizes = [8, 64], strides = [1, 1]} : vector<8x256xf32> to vector<8x64xf32>
    %72 = vector.extract_strided_slice %70 {offsets = [0, 64], sizes = [8, 64], strides = [1, 1]} : vector<8x256xf32> to vector<8x64xf32>
    %73 = vector.extract_strided_slice %70 {offsets = [0, 128], sizes = [8, 64], strides = [1, 1]} : vector<8x256xf32> to vector<8x64xf32>
    %cst_31 = arith.constant 2.000000e+00 : f32
    %74 = vector.broadcast %cst_31 : f32 to vector<8x64xf32>
    %75 = arith.mulf %74, %73 : vector<8x64xf32>
    %cst_32 = arith.constant 1.000000e+00 : f32
    %76 = vector.broadcast %cst_32 : f32 to vector<8x64xf32>
    %77 = arith.subf %75, %76 : vector<8x64xf32>
    %78 = vector.extract_strided_slice %70 {offsets = [0, 192], sizes = [8, 64], strides = [1, 1]} : vector<8x256xf32> to vector<8x64xf32>
    %79 = arith.mulf %72, %37 : vector<8x64xf32>
    %80 = arith.mulf %71, %77 : vector<8x64xf32>
    %81 = arith.addf %79, %80 : vector<8x64xf32>
    %82 = math.tanh %81 : vector<8x64xf32>
    %83 = arith.mulf %78, %82 : vector<8x64xf32>
    %84 = tpu.concatenate %83, %61 in 1 : vector<8x64xf32>, vector<8x64xf32> -> vector<8x128xf32>
    %85 = arith.truncf %84 : vector<8x128xf32> to vector<8x128xbf16>
    %cst_33 = arith.constant dense<0.000000e+00> : vector<8x256xf32>
    %86 = tpu.matmul %85, %10, %cst_33 {dimension_numbers = #tpu.dot_dimension_numbers<[1], [0], [0], [1], [0, 0, 1, 1], [], []>} : vector<8x128xbf16>, vector<128x256xbf16>, vector<8x256xf32> -> vector<8x256xf32>
    %87 = arith.addf %86, %13 : vector<8x256xf32>
    %88 = arith.negf %87 : vector<8x256xf32>
    %89 = math.exp %88 : vector<8x256xf32>
    %cst_34 = arith.constant 1.000000e+00 : f32
    %90 = vector.broadcast %cst_34 : f32 to vector<8x256xf32>
    %91 = arith.addf %90, %89 : vector<8x256xf32>
    %92 = arith.divf %90, %91 : vector<8x256xf32>
    %93 = vector.extract_strided_slice %92 {offsets = [0, 0], sizes = [8, 64], strides = [1, 1]} : vector<8x256xf32> to vector<8x64xf32>
    %94 = vector.extract_strided_slice %92 {offsets = [0, 64], sizes = [8, 64], strides = [1, 1]} : vector<8x256xf32> to vector<8x64xf32>
    %95 = vector.extract_strided_slice %92 {offsets = [0, 128], sizes = [8, 64], strides = [1, 1]} : vector<8x256xf32> to vector<8x64xf32>
    %cst_35 = arith.constant 2.000000e+00 : f32
    %96 = vector.broadcast %cst_35 : f32 to vector<8x64xf32>
    %97 = arith.mulf %96, %95 : vector<8x64xf32>
    %cst_36 = arith.constant 1.000000e+00 : f32
    %98 = vector.broadcast %cst_36 : f32 to vector<8x64xf32>
    %99 = arith.subf %97, %98 : vector<8x64xf32>
    %100 = vector.extract_strided_slice %92 {offsets = [0, 192], sizes = [8, 64], strides = [1, 1]} : vector<8x256xf32> to vector<8x64xf32>
    %101 = arith.mulf %94, %59 : vector<8x64xf32>
    %102 = arith.mulf %93, %99 : vector<8x64xf32>
    %103 = arith.addf %101, %102 : vector<8x64xf32>
    %104 = math.tanh %103 : vector<8x64xf32>
    %105 = arith.mulf %100, %104 : vector<8x64xf32>
    %c16 = arith.constant 16 : index
    %c0_37 = arith.constant 0 : index
    %106 = vector.load %arg10[%c16, %c0_37] : memref<64x256xf32, #tpu.memory_space<vmem>>, vector<8x256xf32>
    %107 = arith.truncf %83 : vector<8x64xf32> to vector<8x64xbf16>
    %cst_38 = arith.constant dense<0.000000e+00> : vector<8x256xf32>
    %108 = tpu.matmul %107, %9, %cst_38 {dimension_numbers = #tpu.dot_dimension_numbers<[1], [0], [0], [1], [0, 0, 1, 1], [], []>} : vector<8x64xbf16>, vector<64x256xbf16>, vector<8x256xf32> -> vector<8x256xf32>
    %109 = arith.addf %106, %108 : vector<8x256xf32>
    %110 = arith.negf %109 : vector<8x256xf32>
    %111 = math.exp %110 : vector<8x256xf32>
    %cst_39 = arith.constant 1.000000e+00 : f32
    %112 = vector.broadcast %cst_39 : f32 to vector<8x256xf32>
    %113 = arith.addf %112, %111 : vector<8x256xf32>
    %114 = arith.divf %112, %113 : vector<8x256xf32>
    %115 = vector.extract_strided_slice %114 {offsets = [0, 0], sizes = [8, 64], strides = [1, 1]} : vector<8x256xf32> to vector<8x64xf32>
    %116 = vector.extract_strided_slice %114 {offsets = [0, 64], sizes = [8, 64], strides = [1, 1]} : vector<8x256xf32> to vector<8x64xf32>
    %117 = vector.extract_strided_slice %114 {offsets = [0, 128], sizes = [8, 64], strides = [1, 1]} : vector<8x256xf32> to vector<8x64xf32>
    %cst_40 = arith.constant 2.000000e+00 : f32
    %118 = vector.broadcast %cst_40 : f32 to vector<8x64xf32>
    %119 = arith.mulf %118, %117 : vector<8x64xf32>
    %cst_41 = arith.constant 1.000000e+00 : f32
    %120 = vector.broadcast %cst_41 : f32 to vector<8x64xf32>
    %121 = arith.subf %119, %120 : vector<8x64xf32>
    %122 = vector.extract_strided_slice %114 {offsets = [0, 192], sizes = [8, 64], strides = [1, 1]} : vector<8x256xf32> to vector<8x64xf32>
    %123 = arith.mulf %116, %81 : vector<8x64xf32>
    %124 = arith.mulf %115, %121 : vector<8x64xf32>
    %125 = arith.addf %123, %124 : vector<8x64xf32>
    %126 = math.tanh %125 : vector<8x64xf32>
    %127 = arith.mulf %122, %126 : vector<8x64xf32>
    %128 = tpu.concatenate %127, %105 in 1 : vector<8x64xf32>, vector<8x64xf32> -> vector<8x128xf32>
    %129 = arith.truncf %128 : vector<8x128xf32> to vector<8x128xbf16>
    %cst_42 = arith.constant dense<0.000000e+00> : vector<8x256xf32>
    %130 = tpu.matmul %129, %10, %cst_42 {dimension_numbers = #tpu.dot_dimension_numbers<[1], [0], [0], [1], [0, 0, 1, 1], [], []>} : vector<8x128xbf16>, vector<128x256xbf16>, vector<8x256xf32> -> vector<8x256xf32>
    %131 = arith.addf %130, %13 : vector<8x256xf32>
    %132 = arith.negf %131 : vector<8x256xf32>
    %133 = math.exp %132 : vector<8x256xf32>
    %cst_43 = arith.constant 1.000000e+00 : f32
    %134 = vector.broadcast %cst_43 : f32 to vector<8x256xf32>
    %135 = arith.addf %134, %133 : vector<8x256xf32>
    %136 = arith.divf %134, %135 : vector<8x256xf32>
    %137 = vector.extract_strided_slice %136 {offsets = [0, 0], sizes = [8, 64], strides = [1, 1]} : vector<8x256xf32> to vector<8x64xf32>
    %138 = vector.extract_strided_slice %136 {offsets = [0, 64], sizes = [8, 64], strides = [1, 1]} : vector<8x256xf32> to vector<8x64xf32>
    %139 = vector.extract_strided_slice %136 {offsets = [0, 128], sizes = [8, 64], strides = [1, 1]} : vector<8x256xf32> to vector<8x64xf32>
    %cst_44 = arith.constant 2.000000e+00 : f32
    %140 = vector.broadcast %cst_44 : f32 to vector<8x64xf32>
    %141 = arith.mulf %140, %139 : vector<8x64xf32>
    %cst_45 = arith.constant 1.000000e+00 : f32
    %142 = vector.broadcast %cst_45 : f32 to vector<8x64xf32>
    %143 = arith.subf %141, %142 : vector<8x64xf32>
    %144 = vector.extract_strided_slice %136 {offsets = [0, 192], sizes = [8, 64], strides = [1, 1]} : vector<8x256xf32> to vector<8x64xf32>
    %145 = arith.mulf %138, %103 : vector<8x64xf32>
    %146 = arith.mulf %137, %143 : vector<8x64xf32>
    %147 = arith.addf %145, %146 : vector<8x64xf32>
    %148 = math.tanh %147 : vector<8x64xf32>
    %149 = arith.mulf %144, %148 : vector<8x64xf32>
    %c24 = arith.constant 24 : index
    %c0_46 = arith.constant 0 : index
    %150 = vector.load %arg10[%c24, %c0_46] : memref<64x256xf32, #tpu.memory_space<vmem>>, vector<8x256xf32>
    %151 = arith.truncf %127 : vector<8x64xf32> to vector<8x64xbf16>
    %cst_47 = arith.constant dense<0.000000e+00> : vector<8x256xf32>
    %152 = tpu.matmul %151, %9, %cst_47 {dimension_numbers = #tpu.dot_dimension_numbers<[1], [0], [0], [1], [0, 0, 1, 1], [], []>} : vector<8x64xbf16>, vector<64x256xbf16>, vector<8x256xf32> -> vector<8x256xf32>
    %153 = arith.addf %150, %152 : vector<8x256xf32>
    %154 = arith.negf %153 : vector<8x256xf32>
    %155 = math.exp %154 : vector<8x256xf32>
    %cst_48 = arith.constant 1.000000e+00 : f32
    %156 = vector.broadcast %cst_48 : f32 to vector<8x256xf32>
    %157 = arith.addf %156, %155 : vector<8x256xf32>
    %158 = arith.divf %156, %157 : vector<8x256xf32>
    %159 = vector.extract_strided_slice %158 {offsets = [0, 0], sizes = [8, 64], strides = [1, 1]} : vector<8x256xf32> to vector<8x64xf32>
    %160 = vector.extract_strided_slice %158 {offsets = [0, 64], sizes = [8, 64], strides = [1, 1]} : vector<8x256xf32> to vector<8x64xf32>
    %161 = vector.extract_strided_slice %158 {offsets = [0, 128], sizes = [8, 64], strides = [1, 1]} : vector<8x256xf32> to vector<8x64xf32>
    %cst_49 = arith.constant 2.000000e+00 : f32
    %162 = vector.broadcast %cst_49 : f32 to vector<8x64xf32>
    %163 = arith.mulf %162, %161 : vector<8x64xf32>
    %cst_50 = arith.constant 1.000000e+00 : f32
    %164 = vector.broadcast %cst_50 : f32 to vector<8x64xf32>
    %165 = arith.subf %163, %164 : vector<8x64xf32>
    %166 = vector.extract_strided_slice %158 {offsets = [0, 192], sizes = [8, 64], strides = [1, 1]} : vector<8x256xf32> to vector<8x64xf32>
    %167 = arith.mulf %160, %125 : vector<8x64xf32>
    %168 = arith.mulf %159, %165 : vector<8x64xf32>
    %169 = arith.addf %167, %168 : vector<8x64xf32>
    %170 = math.tanh %169 : vector<8x64xf32>
    %171 = arith.mulf %166, %170 : vector<8x64xf32>
    %172 = tpu.concatenate %171, %149 in 1 : vector<8x64xf32>, vector<8x64xf32> -> vector<8x128xf32>
    %173 = arith.truncf %172 : vector<8x128xf32> to vector<8x128xbf16>
    %cst_51 = arith.constant dense<0.000000e+00> : vector<8x256xf32>
    %174 = tpu.matmul %173, %10, %cst_51 {dimension_numbers = #tpu.dot_dimension_numbers<[1], [0], [0], [1], [0, 0, 1, 1], [], []>} : vector<8x128xbf16>, vector<128x256xbf16>, vector<8x256xf32> -> vector<8x256xf32>
    %175 = arith.addf %174, %13 : vector<8x256xf32>
    %176 = arith.negf %175 : vector<8x256xf32>
    %177 = math.exp %176 : vector<8x256xf32>
    %cst_52 = arith.constant 1.000000e+00 : f32
    %178 = vector.broadcast %cst_52 : f32 to vector<8x256xf32>
    %179 = arith.addf %178, %177 : vector<8x256xf32>
    %180 = arith.divf %178, %179 : vector<8x256xf32>
    %181 = vector.extract_strided_slice %180 {offsets = [0, 0], sizes = [8, 64], strides = [1, 1]} : vector<8x256xf32> to vector<8x64xf32>
    %182 = vector.extract_strided_slice %180 {offsets = [0, 64], sizes = [8, 64], strides = [1, 1]} : vector<8x256xf32> to vector<8x64xf32>
    %183 = vector.extract_strided_slice %180 {offsets = [0, 128], sizes = [8, 64], strides = [1, 1]} : vector<8x256xf32> to vector<8x64xf32>
    %cst_53 = arith.constant 2.000000e+00 : f32
    %184 = vector.broadcast %cst_53 : f32 to vector<8x64xf32>
    %185 = arith.mulf %184, %183 : vector<8x64xf32>
    %cst_54 = arith.constant 1.000000e+00 : f32
    %186 = vector.broadcast %cst_54 : f32 to vector<8x64xf32>
    %187 = arith.subf %185, %186 : vector<8x64xf32>
    %188 = vector.extract_strided_slice %180 {offsets = [0, 192], sizes = [8, 64], strides = [1, 1]} : vector<8x256xf32> to vector<8x64xf32>
    %189 = arith.mulf %182, %147 : vector<8x64xf32>
    %190 = arith.mulf %181, %187 : vector<8x64xf32>
    %191 = arith.addf %189, %190 : vector<8x64xf32>
    %192 = math.tanh %191 : vector<8x64xf32>
    %193 = arith.mulf %188, %192 : vector<8x64xf32>
    %c32 = arith.constant 32 : index
    %c0_55 = arith.constant 0 : index
    %194 = vector.load %arg10[%c32, %c0_55] : memref<64x256xf32, #tpu.memory_space<vmem>>, vector<8x256xf32>
    %195 = arith.truncf %171 : vector<8x64xf32> to vector<8x64xbf16>
    %cst_56 = arith.constant dense<0.000000e+00> : vector<8x256xf32>
    %196 = tpu.matmul %195, %9, %cst_56 {dimension_numbers = #tpu.dot_dimension_numbers<[1], [0], [0], [1], [0, 0, 1, 1], [], []>} : vector<8x64xbf16>, vector<64x256xbf16>, vector<8x256xf32> -> vector<8x256xf32>
    %197 = arith.addf %194, %196 : vector<8x256xf32>
    %198 = arith.negf %197 : vector<8x256xf32>
    %199 = math.exp %198 : vector<8x256xf32>
    %cst_57 = arith.constant 1.000000e+00 : f32
    %200 = vector.broadcast %cst_57 : f32 to vector<8x256xf32>
    %201 = arith.addf %200, %199 : vector<8x256xf32>
    %202 = arith.divf %200, %201 : vector<8x256xf32>
    %203 = vector.extract_strided_slice %202 {offsets = [0, 0], sizes = [8, 64], strides = [1, 1]} : vector<8x256xf32> to vector<8x64xf32>
    %204 = vector.extract_strided_slice %202 {offsets = [0, 64], sizes = [8, 64], strides = [1, 1]} : vector<8x256xf32> to vector<8x64xf32>
    %205 = vector.extract_strided_slice %202 {offsets = [0, 128], sizes = [8, 64], strides = [1, 1]} : vector<8x256xf32> to vector<8x64xf32>
    %cst_58 = arith.constant 2.000000e+00 : f32
    %206 = vector.broadcast %cst_58 : f32 to vector<8x64xf32>
    %207 = arith.mulf %206, %205 : vector<8x64xf32>
    %cst_59 = arith.constant 1.000000e+00 : f32
    %208 = vector.broadcast %cst_59 : f32 to vector<8x64xf32>
    %209 = arith.subf %207, %208 : vector<8x64xf32>
    %210 = vector.extract_strided_slice %202 {offsets = [0, 192], sizes = [8, 64], strides = [1, 1]} : vector<8x256xf32> to vector<8x64xf32>
    %211 = arith.mulf %204, %169 : vector<8x64xf32>
    %212 = arith.mulf %203, %209 : vector<8x64xf32>
    %213 = arith.addf %211, %212 : vector<8x64xf32>
    %214 = math.tanh %213 : vector<8x64xf32>
    %215 = arith.mulf %210, %214 : vector<8x64xf32>
    %216 = tpu.concatenate %215, %193 in 1 : vector<8x64xf32>, vector<8x64xf32> -> vector<8x128xf32>
    %217 = arith.truncf %216 : vector<8x128xf32> to vector<8x128xbf16>
    %cst_60 = arith.constant dense<0.000000e+00> : vector<8x256xf32>
    %218 = tpu.matmul %217, %10, %cst_60 {dimension_numbers = #tpu.dot_dimension_numbers<[1], [0], [0], [1], [0, 0, 1, 1], [], []>} : vector<8x128xbf16>, vector<128x256xbf16>, vector<8x256xf32> -> vector<8x256xf32>
    %219 = arith.addf %218, %13 : vector<8x256xf32>
    %220 = arith.negf %219 : vector<8x256xf32>
    %221 = math.exp %220 : vector<8x256xf32>
    %cst_61 = arith.constant 1.000000e+00 : f32
    %222 = vector.broadcast %cst_61 : f32 to vector<8x256xf32>
    %223 = arith.addf %222, %221 : vector<8x256xf32>
    %224 = arith.divf %222, %223 : vector<8x256xf32>
    %225 = vector.extract_strided_slice %224 {offsets = [0, 0], sizes = [8, 64], strides = [1, 1]} : vector<8x256xf32> to vector<8x64xf32>
    %226 = vector.extract_strided_slice %224 {offsets = [0, 64], sizes = [8, 64], strides = [1, 1]} : vector<8x256xf32> to vector<8x64xf32>
    %227 = vector.extract_strided_slice %224 {offsets = [0, 128], sizes = [8, 64], strides = [1, 1]} : vector<8x256xf32> to vector<8x64xf32>
    %cst_62 = arith.constant 2.000000e+00 : f32
    %228 = vector.broadcast %cst_62 : f32 to vector<8x64xf32>
    %229 = arith.mulf %228, %227 : vector<8x64xf32>
    %cst_63 = arith.constant 1.000000e+00 : f32
    %230 = vector.broadcast %cst_63 : f32 to vector<8x64xf32>
    %231 = arith.subf %229, %230 : vector<8x64xf32>
    %232 = vector.extract_strided_slice %224 {offsets = [0, 192], sizes = [8, 64], strides = [1, 1]} : vector<8x256xf32> to vector<8x64xf32>
    %233 = arith.mulf %226, %191 : vector<8x64xf32>
    %234 = arith.mulf %225, %231 : vector<8x64xf32>
    %235 = arith.addf %233, %234 : vector<8x64xf32>
    %236 = math.tanh %235 : vector<8x64xf32>
    %237 = arith.mulf %232, %236 : vector<8x64xf32>
    %c40 = arith.constant 40 : index
    %c0_64 = arith.constant 0 : index
    %238 = vector.load %arg10[%c40, %c0_64] : memref<64x256xf32, #tpu.memory_space<vmem>>, vector<8x256xf32>
    %239 = arith.truncf %215 : vector<8x64xf32> to vector<8x64xbf16>
    %cst_65 = arith.constant dense<0.000000e+00> : vector<8x256xf32>
    %240 = tpu.matmul %239, %9, %cst_65 {dimension_numbers = #tpu.dot_dimension_numbers<[1], [0], [0], [1], [0, 0, 1, 1], [], []>} : vector<8x64xbf16>, vector<64x256xbf16>, vector<8x256xf32> -> vector<8x256xf32>
    %241 = arith.addf %238, %240 : vector<8x256xf32>
    %242 = arith.negf %241 : vector<8x256xf32>
    %243 = math.exp %242 : vector<8x256xf32>
    %cst_66 = arith.constant 1.000000e+00 : f32
    %244 = vector.broadcast %cst_66 : f32 to vector<8x256xf32>
    %245 = arith.addf %244, %243 : vector<8x256xf32>
    %246 = arith.divf %244, %245 : vector<8x256xf32>
    %247 = vector.extract_strided_slice %246 {offsets = [0, 0], sizes = [8, 64], strides = [1, 1]} : vector<8x256xf32> to vector<8x64xf32>
    %248 = vector.extract_strided_slice %246 {offsets = [0, 64], sizes = [8, 64], strides = [1, 1]} : vector<8x256xf32> to vector<8x64xf32>
    %249 = vector.extract_strided_slice %246 {offsets = [0, 128], sizes = [8, 64], strides = [1, 1]} : vector<8x256xf32> to vector<8x64xf32>
    %cst_67 = arith.constant 2.000000e+00 : f32
    %250 = vector.broadcast %cst_67 : f32 to vector<8x64xf32>
    %251 = arith.mulf %250, %249 : vector<8x64xf32>
    %cst_68 = arith.constant 1.000000e+00 : f32
    %252 = vector.broadcast %cst_68 : f32 to vector<8x64xf32>
    %253 = arith.subf %251, %252 : vector<8x64xf32>
    %254 = vector.extract_strided_slice %246 {offsets = [0, 192], sizes = [8, 64], strides = [1, 1]} : vector<8x256xf32> to vector<8x64xf32>
    %255 = arith.mulf %248, %213 : vector<8x64xf32>
    %256 = arith.mulf %247, %253 : vector<8x64xf32>
    %257 = arith.addf %255, %256 : vector<8x64xf32>
    %258 = math.tanh %257 : vector<8x64xf32>
    %259 = arith.mulf %254, %258 : vector<8x64xf32>
    %260 = tpu.concatenate %259, %237 in 1 : vector<8x64xf32>, vector<8x64xf32> -> vector<8x128xf32>
    %261 = arith.truncf %260 : vector<8x128xf32> to vector<8x128xbf16>
    %cst_69 = arith.constant dense<0.000000e+00> : vector<8x256xf32>
    %262 = tpu.matmul %261, %10, %cst_69 {dimension_numbers = #tpu.dot_dimension_numbers<[1], [0], [0], [1], [0, 0, 1, 1], [], []>} : vector<8x128xbf16>, vector<128x256xbf16>, vector<8x256xf32> -> vector<8x256xf32>
    %263 = arith.addf %262, %13 : vector<8x256xf32>
    %264 = arith.negf %263 : vector<8x256xf32>
    %265 = math.exp %264 : vector<8x256xf32>
    %cst_70 = arith.constant 1.000000e+00 : f32
    %266 = vector.broadcast %cst_70 : f32 to vector<8x256xf32>
    %267 = arith.addf %266, %265 : vector<8x256xf32>
    %268 = arith.divf %266, %267 : vector<8x256xf32>
    %269 = vector.extract_strided_slice %268 {offsets = [0, 0], sizes = [8, 64], strides = [1, 1]} : vector<8x256xf32> to vector<8x64xf32>
    %270 = vector.extract_strided_slice %268 {offsets = [0, 64], sizes = [8, 64], strides = [1, 1]} : vector<8x256xf32> to vector<8x64xf32>
    %271 = vector.extract_strided_slice %268 {offsets = [0, 128], sizes = [8, 64], strides = [1, 1]} : vector<8x256xf32> to vector<8x64xf32>
    %cst_71 = arith.constant 2.000000e+00 : f32
    %272 = vector.broadcast %cst_71 : f32 to vector<8x64xf32>
    %273 = arith.mulf %272, %271 : vector<8x64xf32>
    %cst_72 = arith.constant 1.000000e+00 : f32
    %274 = vector.broadcast %cst_72 : f32 to vector<8x64xf32>
    %275 = arith.subf %273, %274 : vector<8x64xf32>
    %276 = vector.extract_strided_slice %268 {offsets = [0, 192], sizes = [8, 64], strides = [1, 1]} : vector<8x256xf32> to vector<8x64xf32>
    %277 = arith.mulf %270, %235 : vector<8x64xf32>
    %278 = arith.mulf %269, %275 : vector<8x64xf32>
    %279 = arith.addf %277, %278 : vector<8x64xf32>
    %280 = math.tanh %279 : vector<8x64xf32>
    %281 = arith.mulf %276, %280 : vector<8x64xf32>
    %c48 = arith.constant 48 : index
    %c0_73 = arith.constant 0 : index
    %282 = vector.load %arg10[%c48, %c0_73] : memref<64x256xf32, #tpu.memory_space<vmem>>, vector<8x256xf32>
    %283 = arith.truncf %259 : vector<8x64xf32> to vector<8x64xbf16>
    %cst_74 = arith.constant dense<0.000000e+00> : vector<8x256xf32>
    %284 = tpu.matmul %283, %9, %cst_74 {dimension_numbers = #tpu.dot_dimension_numbers<[1], [0], [0], [1], [0, 0, 1, 1], [], []>} : vector<8x64xbf16>, vector<64x256xbf16>, vector<8x256xf32> -> vector<8x256xf32>
    %285 = arith.addf %282, %284 : vector<8x256xf32>
    %286 = arith.negf %285 : vector<8x256xf32>
    %287 = math.exp %286 : vector<8x256xf32>
    %cst_75 = arith.constant 1.000000e+00 : f32
    %288 = vector.broadcast %cst_75 : f32 to vector<8x256xf32>
    %289 = arith.addf %288, %287 : vector<8x256xf32>
    %290 = arith.divf %288, %289 : vector<8x256xf32>
    %291 = vector.extract_strided_slice %290 {offsets = [0, 0], sizes = [8, 64], strides = [1, 1]} : vector<8x256xf32> to vector<8x64xf32>
    %292 = vector.extract_strided_slice %290 {offsets = [0, 64], sizes = [8, 64], strides = [1, 1]} : vector<8x256xf32> to vector<8x64xf32>
    %293 = vector.extract_strided_slice %290 {offsets = [0, 128], sizes = [8, 64], strides = [1, 1]} : vector<8x256xf32> to vector<8x64xf32>
    %cst_76 = arith.constant 2.000000e+00 : f32
    %294 = vector.broadcast %cst_76 : f32 to vector<8x64xf32>
    %295 = arith.mulf %294, %293 : vector<8x64xf32>
    %cst_77 = arith.constant 1.000000e+00 : f32
    %296 = vector.broadcast %cst_77 : f32 to vector<8x64xf32>
    %297 = arith.subf %295, %296 : vector<8x64xf32>
    %298 = vector.extract_strided_slice %290 {offsets = [0, 192], sizes = [8, 64], strides = [1, 1]} : vector<8x256xf32> to vector<8x64xf32>
    %299 = arith.mulf %292, %257 : vector<8x64xf32>
    %300 = arith.mulf %291, %297 : vector<8x64xf32>
    %301 = arith.addf %299, %300 : vector<8x64xf32>
    %302 = math.tanh %301 : vector<8x64xf32>
    %303 = arith.mulf %298, %302 : vector<8x64xf32>
    %304 = tpu.concatenate %303, %281 in 1 : vector<8x64xf32>, vector<8x64xf32> -> vector<8x128xf32>
    %305 = arith.truncf %304 : vector<8x128xf32> to vector<8x128xbf16>
    %cst_78 = arith.constant dense<0.000000e+00> : vector<8x256xf32>
    %306 = tpu.matmul %305, %10, %cst_78 {dimension_numbers = #tpu.dot_dimension_numbers<[1], [0], [0], [1], [0, 0, 1, 1], [], []>} : vector<8x128xbf16>, vector<128x256xbf16>, vector<8x256xf32> -> vector<8x256xf32>
    %307 = arith.addf %306, %13 : vector<8x256xf32>
    %308 = arith.negf %307 : vector<8x256xf32>
    %309 = math.exp %308 : vector<8x256xf32>
    %cst_79 = arith.constant 1.000000e+00 : f32
    %310 = vector.broadcast %cst_79 : f32 to vector<8x256xf32>
    %311 = arith.addf %310, %309 : vector<8x256xf32>
    %312 = arith.divf %310, %311 : vector<8x256xf32>
    %313 = vector.extract_strided_slice %312 {offsets = [0, 0], sizes = [8, 64], strides = [1, 1]} : vector<8x256xf32> to vector<8x64xf32>
    %314 = vector.extract_strided_slice %312 {offsets = [0, 64], sizes = [8, 64], strides = [1, 1]} : vector<8x256xf32> to vector<8x64xf32>
    %315 = vector.extract_strided_slice %312 {offsets = [0, 128], sizes = [8, 64], strides = [1, 1]} : vector<8x256xf32> to vector<8x64xf32>
    %cst_80 = arith.constant 2.000000e+00 : f32
    %316 = vector.broadcast %cst_80 : f32 to vector<8x64xf32>
    %317 = arith.mulf %316, %315 : vector<8x64xf32>
    %cst_81 = arith.constant 1.000000e+00 : f32
    %318 = vector.broadcast %cst_81 : f32 to vector<8x64xf32>
    %319 = arith.subf %317, %318 : vector<8x64xf32>
    %320 = vector.extract_strided_slice %312 {offsets = [0, 192], sizes = [8, 64], strides = [1, 1]} : vector<8x256xf32> to vector<8x64xf32>
    %321 = arith.mulf %314, %279 : vector<8x64xf32>
    %322 = arith.mulf %313, %319 : vector<8x64xf32>
    %323 = arith.addf %321, %322 : vector<8x64xf32>
    %324 = math.tanh %323 : vector<8x64xf32>
    %325 = arith.mulf %320, %324 : vector<8x64xf32>
    %c56 = arith.constant 56 : index
    %c0_82 = arith.constant 0 : index
    %326 = vector.load %arg10[%c56, %c0_82] : memref<64x256xf32, #tpu.memory_space<vmem>>, vector<8x256xf32>
    %327 = arith.truncf %303 : vector<8x64xf32> to vector<8x64xbf16>
    %cst_83 = arith.constant dense<0.000000e+00> : vector<8x256xf32>
    %328 = tpu.matmul %327, %9, %cst_83 {dimension_numbers = #tpu.dot_dimension_numbers<[1], [0], [0], [1], [0, 0, 1, 1], [], []>} : vector<8x64xbf16>, vector<64x256xbf16>, vector<8x256xf32> -> vector<8x256xf32>
    %329 = arith.addf %326, %328 : vector<8x256xf32>
    %330 = arith.negf %329 : vector<8x256xf32>
    %331 = math.exp %330 : vector<8x256xf32>
    %cst_84 = arith.constant 1.000000e+00 : f32
    %332 = vector.broadcast %cst_84 : f32 to vector<8x256xf32>
    %333 = arith.addf %332, %331 : vector<8x256xf32>
    %334 = arith.divf %332, %333 : vector<8x256xf32>
    %335 = vector.extract_strided_slice %334 {offsets = [0, 0], sizes = [8, 64], strides = [1, 1]} : vector<8x256xf32> to vector<8x64xf32>
    %336 = vector.extract_strided_slice %334 {offsets = [0, 64], sizes = [8, 64], strides = [1, 1]} : vector<8x256xf32> to vector<8x64xf32>
    %337 = vector.extract_strided_slice %334 {offsets = [0, 128], sizes = [8, 64], strides = [1, 1]} : vector<8x256xf32> to vector<8x64xf32>
    %cst_85 = arith.constant 2.000000e+00 : f32
    %338 = vector.broadcast %cst_85 : f32 to vector<8x64xf32>
    %339 = arith.mulf %338, %337 : vector<8x64xf32>
    %cst_86 = arith.constant 1.000000e+00 : f32
    %340 = vector.broadcast %cst_86 : f32 to vector<8x64xf32>
    %341 = arith.subf %339, %340 : vector<8x64xf32>
    %342 = vector.extract_strided_slice %334 {offsets = [0, 192], sizes = [8, 64], strides = [1, 1]} : vector<8x256xf32> to vector<8x64xf32>
    %343 = arith.mulf %336, %301 : vector<8x64xf32>
    %344 = arith.mulf %335, %341 : vector<8x64xf32>
    %345 = arith.addf %343, %344 : vector<8x64xf32>
    %346 = math.tanh %345 : vector<8x64xf32>
    %347 = arith.mulf %342, %346 : vector<8x64xf32>
    %348 = tpu.concatenate %347, %325 in 1 : vector<8x64xf32>, vector<8x64xf32> -> vector<8x128xf32>
    %349 = arith.truncf %348 : vector<8x128xf32> to vector<8x128xbf16>
    %cst_87 = arith.constant dense<0.000000e+00> : vector<8x256xf32>
    %350 = tpu.matmul %349, %10, %cst_87 {dimension_numbers = #tpu.dot_dimension_numbers<[1], [0], [0], [1], [0, 0, 1, 1], [], []>} : vector<8x128xbf16>, vector<128x256xbf16>, vector<8x256xf32> -> vector<8x256xf32>
    %351 = arith.addf %350, %13 : vector<8x256xf32>
    %352 = arith.negf %351 : vector<8x256xf32>
    %353 = math.exp %352 : vector<8x256xf32>
    %cst_88 = arith.constant 1.000000e+00 : f32
    %354 = vector.broadcast %cst_88 : f32 to vector<8x256xf32>
    %355 = arith.addf %354, %353 : vector<8x256xf32>
    %356 = arith.divf %354, %355 : vector<8x256xf32>
    %357 = vector.extract_strided_slice %356 {offsets = [0, 0], sizes = [8, 64], strides = [1, 1]} : vector<8x256xf32> to vector<8x64xf32>
    %358 = vector.extract_strided_slice %356 {offsets = [0, 64], sizes = [8, 64], strides = [1, 1]} : vector<8x256xf32> to vector<8x64xf32>
    %359 = vector.extract_strided_slice %356 {offsets = [0, 128], sizes = [8, 64], strides = [1, 1]} : vector<8x256xf32> to vector<8x64xf32>
    %cst_89 = arith.constant 2.000000e+00 : f32
    %360 = vector.broadcast %cst_89 : f32 to vector<8x64xf32>
    %361 = arith.mulf %360, %359 : vector<8x64xf32>
    %cst_90 = arith.constant 1.000000e+00 : f32
    %362 = vector.broadcast %cst_90 : f32 to vector<8x64xf32>
    %363 = arith.subf %361, %362 : vector<8x64xf32>
    %364 = vector.extract_strided_slice %356 {offsets = [0, 192], sizes = [8, 64], strides = [1, 1]} : vector<8x256xf32> to vector<8x64xf32>
    %365 = arith.mulf %358, %323 : vector<8x64xf32>
    %366 = arith.mulf %357, %363 : vector<8x64xf32>
    %367 = arith.addf %365, %366 : vector<8x64xf32>
    %368 = math.tanh %367 : vector<8x64xf32>
    %369 = arith.mulf %364, %368 : vector<8x64xf32>
    %c0_91 = arith.constant 0 : index
    %c0_92 = arith.constant 0 : index
    %370 = vector.load %arg7[%c0_91, %c0_92] : memref<1x64xf32, #tpu.memory_space<vmem>>, vector<1x64xf32>
    %371 = vector.broadcast %370 : vector<1x64xf32> to vector<8x64xf32>
    %372 = arith.mulf %369, %371 : vector<8x64xf32>
    %cst_93 = arith.constant dense<0.000000e+00> : vector<8xf32>
    %373 = vector.multi_reduction <add>, %372, %cst_93 [1] : vector<8x64xf32> to vector<8xf32>
    %374 = vector.shape_cast %373 : vector<8xf32> to vector<8x1xf32>
    %c0_94 = arith.constant 0 : index
    %c0_95 = arith.constant 0 : index
    %375 = vector.load %arg8[%c0_94, %c0_95] : memref<1x1xf32, #tpu.memory_space<vmem>>, vector<1x1xf32>
    %376 = vector.broadcast %375 : vector<1x1xf32> to vector<8x1xf32>
    %377 = arith.addf %374, %376 : vector<8x1xf32>
    %378 = arith.negf %377 : vector<8x1xf32>
    %379 = math.exp %378 : vector<8x1xf32>
    %cst_96 = arith.constant 1.000000e+00 : f32
    %380 = vector.broadcast %cst_96 : f32 to vector<8x1xf32>
    %381 = arith.addf %380, %379 : vector<8x1xf32>
    %382 = arith.divf %380, %381 : vector<8x1xf32>
    %383 = vector.shape_cast %382 : vector<8x1xf32> to vector<8x1xf32>
    %384 = vector.broadcast %383 : vector<8x1xf32> to vector<8x128xf32>
    %c0_97 = arith.constant 0 : index
    %c0_98 = arith.constant 0 : index
    %385 = vector.load %arg9[%c0_97, %c0_98] : memref<8x128xf32, #tpu.memory_space<vmem>>, vector<8x128xf32>
    tpu.vector_store %arg9[%c0_97, %c0_98], %384 {strides = array<i32>} : memref<8x128xf32, #tpu.memory_space<vmem>>, vector<8x128xf32>,
    return
  }
  func.func @transform_0(%arg0: i32) -> (i32, i32, i32) {
    %c0_i32 = arith.constant 0 : i32
    %c0_i32_0 = arith.constant 0 : i32
    %c0_i32_1 = arith.constant 0 : i32
    return %arg0, %c0_i32, %c0_i32_0 : i32, i32, i32
  }
  func.func @transform_1(%arg0: i32) -> (i32, i32) {
    %c0_i32 = arith.constant 0 : i32
    %c0_i32_0 = arith.constant 0 : i32
    %c0_i32_1 = arith.constant 0 : i32
    return %c0_i32, %c0_i32_0 : i32, i32
  }
  func.func @transform_2(%arg0: i32) -> (i32, i32) {
    %c0_i32 = arith.constant 0 : i32
    %c0_i32_0 = arith.constant 0 : i32
    %c0_i32_1 = arith.constant 0 : i32
    return %c0_i32, %c0_i32_0 : i32, i32
  }
  func.func @transform_3(%arg0: i32) -> (i32, i32) {
    %c0_i32 = arith.constant 0 : i32
    %c0_i32_0 = arith.constant 0 : i32
    %c0_i32_1 = arith.constant 0 : i32
    return %c0_i32, %c0_i32_0 : i32, i32
  }
  func.func @transform_4(%arg0: i32) -> (i32, i32) {
    %c0_i32 = arith.constant 0 : i32
    %c0_i32_0 = arith.constant 0 : i32
    %c0_i32_1 = arith.constant 0 : i32
    return %c0_i32, %c0_i32_0 : i32, i32
  }
  func.func @transform_5(%arg0: i32) -> (i32, i32) {
    %c0_i32 = arith.constant 0 : i32
    %c0_i32_0 = arith.constant 0 : i32
    %c0_i32_1 = arith.constant 0 : i32
    return %c0_i32, %c0_i32_0 : i32, i32
  }
  func.func @transform_6(%arg0: i32) -> (i32, i32) {
    %c0_i32 = arith.constant 0 : i32
    %c0_i32_0 = arith.constant 0 : i32
    %c0_i32_1 = arith.constant 0 : i32
    return %c0_i32, %c0_i32_0 : i32, i32
  }
  func.func @transform_7(%arg0: i32) -> (i32, i32) {
    %c0_i32 = arith.constant 0 : i32
    %c0_i32_0 = arith.constant 0 : i32
    %c0_i32_1 = arith.constant 0 : i32
    return %c0_i32, %c0_i32_0 : i32, i32
  }
  func.func @transform_8(%arg0: i32) -> (i32, i32) {
    %c0_i32 = arith.constant 0 : i32
    %c0_i32_0 = arith.constant 0 : i32
    return %arg0, %c0_i32 : i32, i32
  }
}

</mosaic_0001>

<llo_original>
// kernel: tpu_custom_call.1
$region0: #{tpu_custom_call.1}
  #allocation0 [shape = 'u32[]', space=smem, size = 0x4, offset = 0x4, fixed_abs, tag = 'smem constant byte address 0x4 - core index']
  #allocation1 [shape = 'u32[144,128]{1,0:T(1,128)}', space=vmem, size = 0x12000, scoped, tag = 'internal scratch']
  #allocation2 [shape = 'f32[64,256]{1,0:T(8,128)}', space=vmem, size = 0x10000, scoped, tag = 'scratch operand']
  #allocation3 [shape = 'f32[1,1]{1,0:T(1,128)S(1)}', space=vmem, size = 0x200, scoped, tag = 'scoped memory for tpu_custom_call.1']
  %s0 = inlined_call_operand.vmem [shape: f32[1,64,6], index: 0, kind: input, shape index: {}]
  %s1 = inlined_call_operand.vmem [shape: bf16[6,256], index: 1, kind: input, shape index: {}]
  %s2 = inlined_call_operand.vmem [shape: bf16[64,256], index: 2, kind: input, shape index: {}]
  %s3 = inlined_call_operand.vmem [shape: f32[1,256], index: 3, kind: input, shape index: {}]
  %s4 = inlined_call_operand.hbm [shape: bf16[128,256], index: 4, kind: input, shape index: {}]
  %s5 = inlined_call_operand.vmem [shape: f32[1,256], index: 5, kind: input, shape index: {}]
  %s6 = inlined_call_operand.vmem [shape: f32[1,64], index: 6, kind: input, shape index: {}]
  %s7 = inlined_call_operand.<no memory space> [shape: f32[1,1], index: 7, kind: input, shape index: {}]
  %s8 = inlined_call_operand.hbm [shape: f32[8,128], index: 8, kind: output, shape index: {}]
  %s9 = sld [smem:[#allocation0]]
  $region46: #{tpu_custom_call.1} parent=0
    _
  %s11 = ssub.s32 1, %s9
  %s12 = scalar_select 0, %s11, %s9
  %v13 = vstv %s7
  %14 = vst [vmem:[#allocation3] sm:$0x1] %v13
  $region1: #{tpu_custom_call.1} parent=0
    #allocation4 [shape = 'u8[65536]{0}', space=vmem, size = 0x10000, scoped, tag = 'input window, operand 4, single buffered']
    #allocation5 [shape = 's32[1]{0}', space=sflag, size = 0x4, scoped, tag = 'scoped memory for tpu_custom_call.1']
    #allocation6 [shape = 's32[1]{0}', space=sflag, size = 0x4, scoped, tag = 'scoped memory for tpu_custom_call.1']
    #allocation7 [shape = 'u8[4096]{0}', space=vmem, size = 0x1000, scoped, tag = 'output window, operand 0, single buffered']
    %15 = vsyncpa [#allocation5], 0
    %16 = vsyncpa [#allocation6], 0
    // Predicated region
    $region2: #{tpu_custom_call.1} parent=1 // pred_check
      _
    $region3: #{tpu_custom_call.1} parent=1 // pred_check_branch
      %18 = sbr.rel (0) target = $region5
    $region4: #{tpu_custom_call.1} parent=1 // pred_region
      _
    $region5: #{tpu_custom_call.1} parent=1 // pred_fallthru
      _
    // Predicated region
    $region6: #{tpu_custom_call.1} parent=1 // pred_check
      _
    $region7: #{tpu_custom_call.1} parent=1 // pred_check_branch
      %20 = sbr.rel (0) target = $region9
    $region8: #{tpu_custom_call.1} parent=1 // pred_region
      _
    $region9: #{tpu_custom_call.1} parent=1 // pred_fallthru
      _
    // Predicated region
    $region10: #{tpu_custom_call.1} parent=1 // pred_check
      _
    $region11: #{tpu_custom_call.1} parent=1 // pred_check_branch
      %22 = sbr.rel (0) target = $region13
    $region12: #{tpu_custom_call.1} parent=1 // pred_region
      _
    $region13: #{tpu_custom_call.1} parent=1 // pred_fallthru
      _
    // Predicated region
    $region14: #{tpu_custom_call.1} parent=1 // pred_check
      _
    $region15: #{tpu_custom_call.1} parent=1 // pred_check_branch
      %24 = sbr.rel (0) target = $region17
    $region16: #{tpu_custom_call.1} parent=1 // pred_region
      _
    $region17: #{tpu_custom_call.1} parent=1 // pred_fallthru
      _
    // Predicated region
    $region18: #{tpu_custom_call.1} parent=1 // pred_check
      _
    $region19: #{tpu_custom_call.1} parent=1 // pred_check_branch
      %26 = sbr.rel (0) target = $region21
    $region20: #{tpu_custom_call.1} parent=1 // pred_region
      %s28 = ssub.s32 2048, 2048
      %29 = vsyncadd [#allocation5], %s28
      %s30 = sshll.u32 [#allocation4], 4
      %s31 = int_to_ptr.vmem [resolvable:$true] %s30
      %36 = dma.hbm_to_vmem [thread:$0]  %s4, 2048, %s31, [#allocation5], 128, 128, 8
    $region21: #{tpu_custom_call.1} parent=1 // pred_fallthru
      _
    // Predicated region
    $region22: #{tpu_custom_call.1} parent=1 // pred_check
      _
    $region23: #{tpu_custom_call.1} parent=1 // pred_check_branch
      %38 = sbr.rel (0) target = $region25
    $region24: #{tpu_custom_call.1} parent=1 // pred_region
      _
    $region25: #{tpu_custom_call.1} parent=1 // pred_fallthru
      _
    // Predicated region
    $region26: #{tpu_custom_call.1} parent=1 // pred_check
      _
    $region27: #{tpu_custom_call.1} parent=1 // pred_check_branch
      %40 = sbr.rel (0) target = $region29
    $region28: #{tpu_custom_call.1} parent=1 // pred_region
      _
    $region29: #{tpu_custom_call.1} parent=1 // pred_fallthru
      _
    // Predicated region
    $region30: #{tpu_custom_call.1} parent=1 // pred_check
      _
    $region31: #{tpu_custom_call.1} parent=1 // pred_check_branch
      %42 = sbr.rel (0) target = $region33
    $region32: #{tpu_custom_call.1} parent=1 // pred_region
      _
    $region33: #{tpu_custom_call.1} parent=1 // pred_fallthru
      _
    // Predicated region
    $region34: #{tpu_custom_call.1} parent=1 // pred_check
      _
    $region35: #{tpu_custom_call.1} parent=1 // pred_check_branch
      %44 = sbr.rel (0) target = $region37
    $region36: #{tpu_custom_call.1} parent=1 // pred_region
      %45 = dma.done [#allocation5], 2048
    $region37: #{tpu_custom_call.1} parent=1 // pred_fallthru
      _
    %v47 = vld [vmem:[%s0] sm:$0xff]
    %v48 = vld [vmem:[%s0 + $0x8] sm:$0xff]
    %v49 = vld [vmem:[%s0 + $0x10] sm:$0xff]
    %v50 = vld [vmem:[%s0 + $0x18] sm:$0xff]
    %v51 = vld [vmem:[%s0 + $0x20] sm:$0xff]
    %v52 = vld [vmem:[%s0 + $0x28] sm:$0xff]
    %v53 = vld [vmem:[%s0 + $0x30] sm:$0xff]
    %v54 = vld [vmem:[%s0 + $0x38] sm:$0xff]
    %v55 = vpack.c.bf16 %v48, %v47
    %v56 = vpack.c.bf16 %v50, %v49
    %v57 = vpack.c.bf16 %v52, %v51
    %v58 = vpack.c.bf16 %v54, %v53
    %v59 = vld [vmem:[%s1] sm:$0x77]
    %v60 = vld [vmem:[%s3] sm:$0x3]
    %v62 = vlaneseq
    %v63 = vshrl.u32 %v62, 7
    %v64 = vsub.s32 0, %v63
    %v65 = vrot.slane %v60, %v64
    %v66 = vlaneseq
    %v67 = vshrl.u32 %v66, 7
    %v68 = vsub.s32 1, %v67
    %v69 = vrot.slane %v60, %v68
    %v73 = vunpack.c.l.b16 %v59
    %v74 = vunpack.c.h.b16 %v59
    %v75 = vpack.c.b16 %v73, %v73
    %v76 = vpack.c.b16 %v74, %v74
    %vm77 = vcmask 48128
    %v79 = vsel %vm77, %v55, 0
    %v82 = vsel %vm77, %v56, 0
    %v85 = vsel %vm77, %v57, 0
    %v88 = vsel %vm77, %v58, 0
    %vm90 = vcmask 1042432
    %v92 = vsel %vm90, %v75, 0
    %v95 = vsel %vm90, %v76, 0
    %97 = vmatprep.subr.bf16.mxu0 %v95
    %98 = vmatpush1.bf16.msra.mxu0 %v92
    %99 = vmatprep.subr.bf16.mxu0 0
    %100 = vmatpush1.bf16.msra.mxu0 0
    %101 = vmatprep.subr.bf16.mxu0 0
    %102 = vmatpush1.bf16.msra.mxu0 0
    %103 = vmatprep.subr.bf16.mxu0 0
    %104 = vmatpush1.bf16.msra.mxu0 0
    %105 = vmatprep.subr.bf16.mxu0 0
    %106 = vmatpush1.bf16.msra.mxu0 0
    %107 = vmatprep.subr.bf16.mxu0 0
    %108 = vmatpush1.bf16.msra.mxu0 0
    %109 = vmatprep.subr.bf16.mxu0 0
    %110 = vmatpush1.bf16.msra.mxu0 0
    %111 = vmatprep.subr.bf16.mxu0 0
    %112 = vmatpush1.bf16.msra.mxu0 0
    %113 = vmatprep.subr.bf16.mxu0 0
    %114 = vmatpush1.bf16.msra.mxu0 0
    %115 = vmatprep.subr.bf16.mxu0 0
    %116 = vmatpush1.bf16.msra.mxu0 0
    %117 = vmatprep.subr.bf16.mxu0 0
    %118 = vmatpush1.bf16.msra.mxu0 0
    %119 = vmatprep.subr.bf16.mxu0 0
    %120 = vmatpush1.bf16.msra.mxu0 0
    %121 = vmatprep.subr.bf16.mxu0 0
    %122 = vmatpush1.bf16.msra.mxu0 0
    %123 = vmatprep.subr.bf16.mxu0 0
    %124 = vmatpush1.bf16.msra.mxu0 0
    %125 = vmatprep.subr.bf16.mxu0 0
    %126 = vmatpush1.bf16.msra.mxu0 0
    %127 = vmatprep.subr.bf16.mxu0 0
    %128 = vmatpush1.bf16.msra.mxu0 0
    %129 = vmatprep.mubr.bf16.mxu0 0
    %130 = vmatmul.mubr.bf16.gmra.mrb[0].mxu0 %v79
    %v131 = vpop.f32.mrb[0].mxu0
    %v132 = vadd.f32 %v65, %v131
    %v133 = vpop.f32.mrb[0].mxu0
    %v134 = vadd.f32 %v69, %v133
    %v135 = vpop.f32.mrb[0].mxu0
    %v136 = vadd.f32 %v65, %v135
    %v137 = vpop.f32.mrb[0].mxu0
    %v138 = vadd.f32 %v69, %v137
    %139 = vmatprep.mubr.bf16.mxu0 0
    %140 = vmatmul.mubr.bf16.gmra.mrb[0].mxu0 %v82
    %v141 = vpop.f32.mrb[0].mxu0
    %v142 = vadd.f32 %v65, %v141
    %v143 = vpop.f32.mrb[0].mxu0
    %v144 = vadd.f32 %v69, %v143
    %v145 = vpop.f32.mrb[0].mxu0
    %v146 = vadd.f32 %v65, %v145
    %v147 = vpop.f32.mrb[0].mxu0
    %v148 = vadd.f32 %v69, %v147
    %149 = vmatprep.mubr.bf16.mxu0 0
    %150 = vmatmul.mubr.bf16.gmra.mrb[0].mxu0 %v85
    %v151 = vpop.f32.mrb[0].mxu0
    %v152 = vadd.f32 %v65, %v151
    %v153 = vpop.f32.mrb[0].mxu0
    %v154 = vadd.f32 %v69, %v153
    %v155 = vpop.f32.mrb[0].mxu0
    %v156 = vadd.f32 %v65, %v155
    %v157 = vpop.f32.mrb[0].mxu0
    %v158 = vadd.f32 %v69, %v157
    %159 = vmatprep.mubr.bf16.mxu0 0
    %160 = vmatmul.mubr.bf16.gmra.mrb[0].mxu0 %v88
    %v161 = vpop.f32.mrb[0].mxu0
    %v162 = vadd.f32 %v65, %v161
    %v163 = vpop.f32.mrb[0].mxu0
    %v164 = vadd.f32 %v69, %v163
    %v165 = vpop.f32.mrb[0].mxu0
    %v166 = vadd.f32 %v65, %v165
    %v167 = vpop.f32.mrb[0].mxu0
    %v168 = vadd.f32 %v69, %v167
    %169 = vdwg.mxu0
    %170 = vst [vmem:[#allocation2] sm:$0xff] %v132
    %171 = vst [vmem:[#allocation2 + $0x8] sm:$0xff] %v134
    %172 = vst [vmem:[#allocation2 + $0x10] sm:$0xff] %v136
    %173 = vst [vmem:[#allocation2 + $0x18] sm:$0xff] %v138
    %174 = vst [vmem:[#allocation2 + $0x20] sm:$0xff] %v142
    %175 = vst [vmem:[#allocation2 + $0x28] sm:$0xff] %v144
    %176 = vst [vmem:[#allocation2 + $0x30] sm:$0xff] %v146
    %177 = vst [vmem:[#allocation2 + $0x38] sm:$0xff] %v148
    %178 = vst [vmem:[#allocation2 + $0x40] sm:$0xff] %v152
    %179 = vst [vmem:[#allocation2 + $0x48] sm:$0xff] %v154
    %180 = vst [vmem:[#allocation2 + $0x50] sm:$0xff] %v156
    %181 = vst [vmem:[#allocation2 + $0x58] sm:$0xff] %v158
    %182 = vst [vmem:[#allocation2 + $0x60] sm:$0xff] %v162
    %183 = vst [vmem:[#allocation2 + $0x68] sm:$0xff] %v164
    %184 = vst [vmem:[#allocation2 + $0x70] sm:$0xff] %v166
    %185 = vst [vmem:[#allocation2 + $0x78] sm:$0xff] %v168
    %v186 = vld [vmem:[%s2] sm:$0xff]
    %v187 = vld [vmem:[%s2 + $0x8] sm:$0xff]
    %v188 = vld [vmem:[%s2 + $0x10] sm:$0xff]
    %v189 = vld [vmem:[%s2 + $0x18] sm:$0xff]
    %v190 = vld [vmem:[%s2 + $0x20] sm:$0xff]
    %v191 = vld [vmem:[%s2 + $0x28] sm:$0xff]
    %v192 = vld [vmem:[%s2 + $0x30] sm:$0xff]
    %v193 = vld [vmem:[%s2 + $0x38] sm:$0xff]
    %v194 = vld [vmem:[#allocation4] sm:$0xff]
    %v195 = vld [vmem:[#allocation4 + $0x8] sm:$0xff]
    %v196 = vld [vmem:[#allocation4 + $0x10] sm:$0xff]
    %v197 = vld [vmem:[#allocation4 + $0x18] sm:$0xff]
    %v198 = vld [vmem:[#allocation4 + $0x20] sm:$0xff]
    %v199 = vld [vmem:[#allocation4 + $0x28] sm:$0xff]
    %v200 = vld [vmem:[#allocation4 + $0x30] sm:$0xff]
    %v201 = vld [vmem:[#allocation4 + $0x38] sm:$0xff]
    %v202 = vld [vmem:[#allocation4 + $0x40] sm:$0xff]
    %v203 = vld [vmem:[#allocation4 + $0x48] sm:$0xff]
    %v204 = vld [vmem:[#allocation4 + $0x50] sm:$0xff]
    %v205 = vld [vmem:[#allocation4 + $0x58] sm:$0xff]
    %v206 = vld [vmem:[#allocation4 + $0x60] sm:$0xff]
    %v207 = vld [vmem:[#allocation4 + $0x68] sm:$0xff]
    %v208 = vld [vmem:[#allocation4 + $0x70] sm:$0xff]
    %v209 = vld [vmem:[#allocation4 + $0x78] sm:$0xff]
    %v210 = vld [vmem:[%s5] sm:$0x3]
    %v212 = vlaneseq
    %v213 = vshrl.u32 %v212, 7
    %v214 = vsub.s32 0, %v213
    %v215 = vrot.slane %v210, %v214
    %v216 = vlaneseq
    %v217 = vshrl.u32 %v216, 7
    %v218 = vsub.s32 1, %v217
    %v219 = vrot.slane %v210, %v218
    %v222 = vld [vmem:[#allocation2] sm:$0xff]
    %v223 = vld [vmem:[#allocation2 + $0x8] sm:$0xff]
    %v232 = vunpack.c.l.b16 %v186
    %v233 = vunpack.c.h.b16 %v186
    %v234 = vunpack.c.l.b16 %v187
    %v235 = vunpack.c.h.b16 %v187
    %v236 = vunpack.c.l.b16 %v188
    %v237 = vunpack.c.h.b16 %v188
    %v238 = vunpack.c.l.b16 %v189
    %v239 = vunpack.c.h.b16 %v189
    %v240 = vunpack.c.l.b16 %v190
    %v241 = vunpack.c.h.b16 %v190
    %v242 = vunpack.c.l.b16 %v191
    %v243 = vunpack.c.h.b16 %v191
    %v244 = vunpack.c.l.b16 %v192
    %v245 = vunpack.c.h.b16 %v192
    %v246 = vunpack.c.l.b16 %v193
    %v247 = vunpack.c.h.b16 %v193
    %v248 = vpack.c.b16 %v234, %v232
    %v249 = vpack.c.b16 %v235, %v233
    %v250 = vpack.c.b16 %v238, %v236
    %v251 = vpack.c.b16 %v239, %v237
    %v252 = vpack.c.b16 %v242, %v240
    %v253 = vpack.c.b16 %v243, %v241
    %v254 = vpack.c.b16 %v246, %v244
    %v255 = vpack.c.b16 %v247, %v245
    %vm264 = vcmask 523264
    %v266 = vsel %vm264, 0, 0
    %268 = vmatprep.subr.bf16.mxu0 %v249
    %269 = vmatpush1.bf16.msra.mxu0 %v248
    %270 = vmatprep.subr.bf16.mxu0 %v251
    %271 = vmatpush1.bf16.msra.mxu0 %v250
    %272 = vmatprep.subr.bf16.mxu0 %v253
    %273 = vmatpush1.bf16.msra.mxu0 %v252
    %274 = vmatprep.subr.bf16.mxu0 %v255
    %275 = vmatpush1.bf16.msra.mxu0 %v254
    %276 = vmatprep.subr.bf16.mxu0 0
    %277 = vmatpush1.bf16.msra.mxu0 0
    %278 = vmatprep.subr.bf16.mxu0 0
    %279 = vmatpush1.bf16.msra.mxu0 0
    %280 = vmatprep.subr.bf16.mxu0 0
    %281 = vmatpush1.bf16.msra.mxu0 0
    %282 = vmatprep.subr.bf16.mxu0 0
    %283 = vmatpush1.bf16.msra.mxu0 0
    %284 = vmatprep.subr.bf16.mxu0 0
    %285 = vmatpush1.bf16.msra.mxu0 0
    %286 = vmatprep.subr.bf16.mxu0 0
    %287 = vmatpush1.bf16.msra.mxu0 0
    %288 = vmatprep.subr.bf16.mxu0 0
    %289 = vmatpush1.bf16.msra.mxu0 0
    %290 = vmatprep.subr.bf16.mxu0 0
    %291 = vmatpush1.bf16.msra.mxu0 0
    %292 = vmatprep.subr.bf16.mxu0 0
    %293 = vmatpush1.bf16.msra.mxu0 0
    %294 = vmatprep.subr.bf16.mxu0 0
    %295 = vmatpush1.bf16.msra.mxu0 0
    %296 = vmatprep.subr.bf16.mxu0 0
    %297 = vmatpush1.bf16.msra.mxu0 0
    %298 = vmatprep.subr.bf16.mxu0 0
    %299 = vmatpush1.bf16.msra.mxu0 0
    %300 = vmatprep.mubr.bf16.mxu0 0
    %301 = vmatmul.mubr.bf16.gmra.mrb[0].mxu0 %v266
    %v302 = vpop.f32.mrb[0].mxu0
    %v303 = vadd.f32 0.0, %v302
    %v304 = vpop.f32.mrb[0].mxu0
    %v305 = vadd.f32 0.0, %v304
    %v306 = vpop.f32.mrb[0].mxu0
    %v307 = vpop.f32.mrb[0].mxu0
    %308 = vdwg.mxu0
    %v309 = vadd.f32 %v222, %v303
    %v310 = vadd.f32 %v223, %v305
    %v311 = vxor.u32 %v309, 2147483648
    %v312 = vxor.u32 %v310, 2147483648
    %v313 = vmul.f32 %v311, 1.442695
    %v314 = vpow.pop %v313
    %v315 = vmul.f32 %v312, 1.442695
    %v316 = vpow.pop %v315
    %v317 = vadd.f32 %v314, 1.0
    %v318 = vadd.f32 %v316, 1.0
    %v319 = vrcp.pop %v317
    %v320 = vmul.f32 1.0, %v319
    %v321 = vrcp.pop %v318
    %v322 = vmul.f32 1.0, %v321
    %v323 = vmul.f32 %v322, 2.0
    %v324 = vsub.f32 %v323, 1.0
    %v325 = vmul.f32 %v320, 0.0
    %v326 = vmul.f32 %v320, %v324
    %328 = vrot.lane.b32.xlu0 %v326, 64
    %v329 = vpop.permute.xlu0 %328
    %v331 = vadd.f32 %v325, %v329
    %v332 = vtanh.pop %v331
    %v333 = vmul.f32 %v322, %v332
    %335 = vrot.lane.b32.xlu0 %v333, 64
    %v336 = vpop.permute.xlu0 %335
    %v338 = vsel %vm264, %v336, 0.0
    %v339 = vpack.c.bf16 %v338, %v338
    %v356 = vunpack.c.l.b16 %v194
    %v357 = vunpack.c.h.b16 %v194
    %v358 = vunpack.c.l.b16 %v195
    %v359 = vunpack.c.h.b16 %v195
    %v360 = vunpack.c.l.b16 %v196
    %v361 = vunpack.c.h.b16 %v196
    %v362 = vunpack.c.l.b16 %v197
    %v363 = vunpack.c.h.b16 %v197
    %v364 = vunpack.c.l.b16 %v198
    %v365 = vunpack.c.h.b16 %v198
    %v366 = vunpack.c.l.b16 %v199
    %v367 = vunpack.c.h.b16 %v199
    %v368 = vunpack.c.l.b16 %v200
    %v369 = vunpack.c.h.b16 %v200
    %v370 = vunpack.c.l.b16 %v201
    %v371 = vunpack.c.h.b16 %v201
    %v372 = vunpack.c.l.b16 %v202
    %v373 = vunpack.c.h.b16 %v202
    %v374 = vunpack.c.l.b16 %v203
    %v375 = vunpack.c.h.b16 %v203
    %v376 = vunpack.c.l.b16 %v204
    %v377 = vunpack.c.h.b16 %v204
    %v378 = vunpack.c.l.b16 %v205
    %v379 = vunpack.c.h.b16 %v205
    %v380 = vunpack.c.l.b16 %v206
    %v381 = vunpack.c.h.b16 %v206
    %v382 = vunpack.c.l.b16 %v207
    %v383 = vunpack.c.h.b16 %v207
    %v384 = vunpack.c.l.b16 %v208
    %v385 = vunpack.c.h.b16 %v208
    %v386 = vunpack.c.l.b16 %v209
    %v387 = vunpack.c.h.b16 %v209
    %v388 = vpack.c.b16 %v358, %v356
    %v389 = vpack.c.b16 %v359, %v357
    %v390 = vpack.c.b16 %v362, %v360
    %v391 = vpack.c.b16 %v363, %v361
    %v392 = vpack.c.b16 %v366, %v364
    %v393 = vpack.c.b16 %v367, %v365
    %v394 = vpack.c.b16 %v370, %v368
    %v395 = vpack.c.b16 %v371, %v369
    %v396 = vpack.c.b16 %v374, %v372
    %v397 = vpack.c.b16 %v375, %v373
    %v398 = vpack.c.b16 %v378, %v376
    %v399 = vpack.c.b16 %v379, %v377
    %v400 = vpack.c.b16 %v382, %v380
    %v401 = vpack.c.b16 %v383, %v381
    %v402 = vpack.c.b16 %v386, %v384
    %v403 = vpack.c.b16 %v387, %v385
    %420 = vmatprep.subr.bf16.mxu0 %v389
    %421 = vmatpush1.bf16.msra.mxu0 %v388
    %422 = vmatprep.subr.bf16.mxu0 %v391
    %423 = vmatpush1.bf16.msra.mxu0 %v390
    %424 = vmatprep.subr.bf16.mxu0 %v393
    %425 = vmatpush1.bf16.msra.mxu0 %v392
    %426 = vmatprep.subr.bf16.mxu0 %v395
    %427 = vmatpush1.bf16.msra.mxu0 %v394
    %428 = vmatprep.subr.bf16.mxu0 %v397
    %429 = vmatpush1.bf16.msra.mxu0 %v396
    %430 = vmatprep.subr.bf16.mxu0 %v399
    %431 = vmatpush1.bf16.msra.mxu0 %v398
    %432 = vmatprep.subr.bf16.mxu0 %v401
    %433 = vmatpush1.bf16.msra.mxu0 %v400
    %434 = vmatprep.subr.bf16.mxu0 %v403
    %435 = vmatpush1.bf16.msra.mxu0 %v402
    %436 = vmatprep.subr.bf16.mxu0 0
    %437 = vmatpush1.bf16.msra.mxu0 0
    %438 = vmatprep.subr.bf16.mxu0 0
    %439 = vmatpush1.bf16.msra.mxu0 0
    %440 = vmatprep.subr.bf16.mxu0 0
    %441 = vmatpush1.bf16.msra.mxu0 0
    %442 = vmatprep.subr.bf16.mxu0 0
    %443 = vmatpush1.bf16.msra.mxu0 0
    %444 = vmatprep.subr.bf16.mxu0 0
    %445 = vmatpush1.bf16.msra.mxu0 0
    %446 = vmatprep.subr.bf16.mxu0 0
    %447 = vmatpush1.bf16.msra.mxu0 0
    %448 = vmatprep.subr.bf16.mxu0 0
    %449 = vmatpush1.bf16.msra.mxu0 0
    %450 = vmatprep.subr.bf16.mxu0 0
    %451 = vmatpush1.bf16.msra.mxu0 0
    %452 = vmatprep.mubr.bf16.mxu0 0
    %453 = vmatmul.mubr.bf16.gmra.mrb[0].mxu0 %v339
    %v454 = vpop.f32.mrb[0].mxu0
    %v455 = vadd.f32 %v215, %v454
    %v456 = vpop.f32.mrb[0].mxu0
    %v457 = vadd.f32 %v219, %v456
    %v458 = vpop.f32.mrb[0].mxu0
    %v459 = vpop.f32.mrb[0].mxu0
    %460 = vdwg.mxu0
    %v461 = vxor.u32 %v455, 2147483648
    %v462 = vxor.u32 %v457, 2147483648
    %v463 = vmul.f32 %v461, 1.442695
    %v464 = vpow.pop %v463
    %v465 = vmul.f32 %v462, 1.442695
    %v466 = vpow.pop %v465
    %v467 = vadd.f32 %v464, 1.0
    %v468 = vadd.f32 %v466, 1.0
    %v469 = vrcp.pop %v467
    %v470 = vmul.f32 1.0, %v469
    %v471 = vrcp.pop %v468
    %v472 = vmul.f32 1.0, %v471
    %v473 = vmul.f32 %v472, 2.0
    %v474 = vsub.f32 %v473, 1.0
    %v475 = vmul.f32 %v470, 0.0
    %v476 = vmul.f32 %v470, %v474
    %478 = vrot.lane.b32.xlu0 %v476, 64
    %v479 = vpop.permute.xlu0 %478
    %v481 = vadd.f32 %v475, %v479
    %v482 = vtanh.pop %v481
    %v483 = vmul.f32 %v472, %v482
    %v484 = vld [vmem:[#allocation2 + $0x10] sm:$0xff]
    %v485 = vld [vmem:[#allocation2 + $0x18] sm:$0xff]
    %v486 = vpack.c.bf16 %v333, %v333
    %488 = vrot.lane.b32.xlu0 %v486, 64
    %v489 = vpop.permute.xlu0 %488
    %v491 = vsel %vm264, %v489, 0
    %493 = vmatprep.subr.bf16.mxu0 %v249
    %494 = vmatpush1.bf16.msra.mxu0 %v248
    %495 = vmatprep.subr.bf16.mxu0 %v251
    %496 = vmatpush1.bf16.msra.mxu0 %v250
    %497 = vmatprep.subr.bf16.mxu0 %v253
    %498 = vmatpush1.bf16.msra.mxu0 %v252
    %499 = vmatprep.subr.bf16.mxu0 %v255
    %500 = vmatpush1.bf16.msra.mxu0 %v254
    %501 = vmatprep.subr.bf16.mxu0 0
    %502 = vmatpush1.bf16.msra.mxu0 0
    %503 = vmatprep.subr.bf16.mxu0 0
    %504 = vmatpush1.bf16.msra.mxu0 0
    %505 = vmatprep.subr.bf16.mxu0 0
    %506 = vmatpush1.bf16.msra.mxu0 0
    %507 = vmatprep.subr.bf16.mxu0 0
    %508 = vmatpush1.bf16.msra.mxu0 0
    %509 = vmatprep.subr.bf16.mxu0 0
    %510 = vmatpush1.bf16.msra.mxu0 0
    %511 = vmatprep.subr.bf16.mxu0 0
    %512 = vmatpush1.bf16.msra.mxu0 0
    %513 = vmatprep.subr.bf16.mxu0 0
    %514 = vmatpush1.bf16.msra.mxu0 0
    %515 = vmatprep.subr.bf16.mxu0 0
    %516 = vmatpush1.bf16.msra.mxu0 0
    %517 = vmatprep.subr.bf16.mxu0 0
    %518 = vmatpush1.bf16.msra.mxu0 0
    %519 = vmatprep.subr.bf16.mxu0 0
    %520 = vmatpush1.bf16.msra.mxu0 0
    %521 = vmatprep.subr.bf16.mxu0 0
    %522 = vmatpush1.bf16.msra.mxu0 0
    %523 = vmatprep.subr.bf16.mxu0 0
    %524 = vmatpush1.bf16.msra.mxu0 0
    %525 = vmatprep.mubr.bf16.mxu0 0
    %526 = vmatmul.mubr.bf16.gmra.mrb[0].mxu0 %v491
    %v527 = vpop.f32.mrb[0].mxu0
    %v528 = vadd.f32 0.0, %v527
    %v529 = vpop.f32.mrb[0].mxu0
    %v530 = vadd.f32 0.0, %v529
    %v531 = vpop.f32.mrb[0].mxu0
    %v532 = vpop.f32.mrb[0].mxu0
    %533 = vdwg.mxu0
    %v534 = vadd.f32 %v484, %v528
    %v535 = vadd.f32 %v485, %v530
    %v536 = vxor.u32 %v534, 2147483648
    %v537 = vxor.u32 %v535, 2147483648
    %v538 = vmul.f32 %v536, 1.442695
    %v539 = vpow.pop %v538
    %v540 = vmul.f32 %v537, 1.442695
    %v541 = vpow.pop %v540
    %v542 = vadd.f32 %v539, 1.0
    %v543 = vadd.f32 %v541, 1.0
    %v544 = vrcp.pop %v542
    %v545 = vmul.f32 1.0, %v544
    %v546 = vrcp.pop %v543
    %v547 = vmul.f32 1.0, %v546
    %v548 = vmul.f32 %v547, 2.0
    %v549 = vsub.f32 %v548, 1.0
    %v550 = vmul.f32 %v545, %v331
    %v551 = vmul.f32 %v545, %v549
    %553 = vrot.lane.b32.xlu0 %v551, 64
    %v554 = vpop.permute.xlu0 %553
    %v556 = vadd.f32 %v550, %v554
    %v557 = vtanh.pop %v556
    %v558 = vmul.f32 %v547, %v557
    %560 = vrot.lane.b32.xlu0 %v558, 64
    %v561 = vpop.permute.xlu0 %560
    %v563 = vsel %vm264, %v561, %v483
    %v564 = vpack.c.bf16 %v563, %v563
    %565 = vmatprep.subr.bf16.mxu0 %v389
    %566 = vmatpush1.bf16.msra.mxu0 %v388
    %567 = vmatprep.subr.bf16.mxu0 %v391
    %568 = vmatpush1.bf16.msra.mxu0 %v390
    %569 = vmatprep.subr.bf16.mxu0 %v393
    %570 = vmatpush1.bf16.msra.mxu0 %v392
    %571 = vmatprep.subr.bf16.mxu0 %v395
    %572 = vmatpush1.bf16.msra.mxu0 %v394
    %573 = vmatprep.subr.bf16.mxu0 %v397
    %574 = vmatpush1.bf16.msra.mxu0 %v396
    %575 = vmatprep.subr.bf16.mxu0 %v399
    %576 = vmatpush1.bf16.msra.mxu0 %v398
    %577 = vmatprep.subr.bf16.mxu0 %v401
    %578 = vmatpush1.bf16.msra.mxu0 %v400
    %579 = vmatprep.subr.bf16.mxu0 %v403
    %580 = vmatpush1.bf16.msra.mxu0 %v402
    %581 = vmatprep.subr.bf16.mxu0 0
    %582 = vmatpush1.bf16.msra.mxu0 0
    %583 = vmatprep.subr.bf16.mxu0 0
    %584 = vmatpush1.bf16.msra.mxu0 0
    %585 = vmatprep.subr.bf16.mxu0 0
    %586 = vmatpush1.bf16.msra.mxu0 0
    %587 = vmatprep.subr.bf16.mxu0 0
    %588 = vmatpush1.bf16.msra.mxu0 0
    %589 = vmatprep.subr.bf16.mxu0 0
    %590 = vmatpush1.bf16.msra.mxu0 0
    %591 = vmatprep.subr.bf16.mxu0 0
    %592 = vmatpush1.bf16.msra.mxu0 0
    %593 = vmatprep.subr.bf16.mxu0 0
    %594 = vmatpush1.bf16.msra.mxu0 0
    %595 = vmatprep.subr.bf16.mxu0 0
    %596 = vmatpush1.bf16.msra.mxu0 0
    %597 = vmatprep.mubr.bf16.mxu0 0
    %598 = vmatmul.mubr.bf16.gmra.mrb[0].mxu0 %v564
    %v599 = vpop.f32.mrb[0].mxu0
    %v600 = vadd.f32 %v215, %v599
    %v601 = vpop.f32.mrb[0].mxu0
    %v602 = vadd.f32 %v219, %v601
    %v603 = vpop.f32.mrb[0].mxu0
    %v604 = vpop.f32.mrb[0].mxu0
    %605 = vdwg.mxu0
    %v606 = vxor.u32 %v600, 2147483648
    %v607 = vxor.u32 %v602, 2147483648
    %v608 = vmul.f32 %v606, 1.442695
    %v609 = vpow.pop %v608
    %v610 = vmul.f32 %v607, 1.442695
    %v611 = vpow.pop %v610
    %v612 = vadd.f32 %v609, 1.0
    %v613 = vadd.f32 %v611, 1.0
    %v614 = vrcp.pop %v612
    %v615 = vmul.f32 1.0, %v614
    %v616 = vrcp.pop %v613
    %v617 = vmul.f32 1.0, %v616
    %v618 = vmul.f32 %v617, 2.0
    %v619 = vsub.f32 %v618, 1.0
    %v620 = vmul.f32 %v615, %v481
    %v621 = vmul.f32 %v615, %v619
    %623 = vrot.lane.b32.xlu0 %v621, 64
    %v624 = vpop.permute.xlu0 %623
    %v626 = vadd.f32 %v620, %v624
    %v627 = vtanh.pop %v626
    %v628 = vmul.f32 %v617, %v627
    %v629 = vld [vmem:[#allocation2 + $0x20] sm:$0xff]
    %v630 = vld [vmem:[#allocation2 + $0x28] sm:$0xff]
    %v631 = vpack.c.bf16 %v558, %v558
    %633 = vrot.lane.b32.xlu0 %v631, 64
    %v634 = vpop.permute.xlu0 %633
    %v636 = vsel %vm264, %v634, 0
    %638 = vmatprep.subr.bf16.mxu0 %v249
    %639 = vmatpush1.bf16.msra.mxu0 %v248
    %640 = vmatprep.subr.bf16.mxu0 %v251
    %641 = vmatpush1.bf16.msra.mxu0 %v250
    %642 = vmatprep.subr.bf16.mxu0 %v253
    %643 = vmatpush1.bf16.msra.mxu0 %v252
    %644 = vmatprep.subr.bf16.mxu0 %v255
    %645 = vmatpush1.bf16.msra.mxu0 %v254
    %646 = vmatprep.subr.bf16.mxu0 0
    %647 = vmatpush1.bf16.msra.mxu0 0
    %648 = vmatprep.subr.bf16.mxu0 0
    %649 = vmatpush1.bf16.msra.mxu0 0
    %650 = vmatprep.subr.bf16.mxu0 0
    %651 = vmatpush1.bf16.msra.mxu0 0
    %652 = vmatprep.subr.bf16.mxu0 0
    %653 = vmatpush1.bf16.msra.mxu0 0
    %654 = vmatprep.subr.bf16.mxu0 0
    %655 = vmatpush1.bf16.msra.mxu0 0
    %656 = vmatprep.subr.bf16.mxu0 0
    %657 = vmatpush1.bf16.msra.mxu0 0
    %658 = vmatprep.subr.bf16.mxu0 0
    %659 = vmatpush1.bf16.msra.mxu0 0
    %660 = vmatprep.subr.bf16.mxu0 0
    %661 = vmatpush1.bf16.msra.mxu0 0
    %662 = vmatprep.subr.bf16.mxu0 0
    %663 = vmatpush1.bf16.msra.mxu0 0
    %664 = vmatprep.subr.bf16.mxu0 0
    %665 = vmatpush1.bf16.msra.mxu0 0
    %666 = vmatprep.subr.bf16.mxu0 0
    %667 = vmatpush1.bf16.msra.mxu0 0
    %668 = vmatprep.subr.bf16.mxu0 0
    %669 = vmatpush1.bf16.msra.mxu0 0
    %670 = vmatprep.mubr.bf16.mxu0 0
    %671 = vmatmul.mubr.bf16.gmra.mrb[0].mxu0 %v636
    %v672 = vpop.f32.mrb[0].mxu0
    %v673 = vadd.f32 0.0, %v672
    %v674 = vpop.f32.mrb[0].mxu0
    %v675 = vadd.f32 0.0, %v674
    %v676 = vpop.f32.mrb[0].mxu0
    %v677 = vpop.f32.mrb[0].mxu0
    %678 = vdwg.mxu0
    %v679 = vadd.f32 %v629, %v673
    %v680 = vadd.f32 %v630, %v675
    %v681 = vxor.u32 %v679, 2147483648
    %v682 = vxor.u32 %v680, 2147483648
    %v683 = vmul.f32 %v681, 1.442695
    %v684 = vpow.pop %v683
    %v685 = vmul.f32 %v682, 1.442695
    %v686 = vpow.pop %v685
    %v687 = vadd.f32 %v684, 1.0
    %v688 = vadd.f32 %v686, 1.0
    %v689 = vrcp.pop %v687
    %v690 = vmul.f32 1.0, %v689
    %v691 = vrcp.pop %v688
    %v692 = vmul.f32 1.0, %v691
    %v693 = vmul.f32 %v692, 2.0
    %v694 = vsub.f32 %v693, 1.0
    %v695 = vmul.f32 %v690, %v556
    %v696 = vmul.f32 %v690, %v694
    %698 = vrot.lane.b32.xlu0 %v696, 64
    %v699 = vpop.permute.xlu0 %698
    %v701 = vadd.f32 %v695, %v699
    %v702 = vtanh.pop %v701
    %v703 = vmul.f32 %v692, %v702
    %705 = vrot.lane.b32.xlu0 %v703, 64
    %v706 = vpop.permute.xlu0 %705
    %v708 = vsel %vm264, %v706, %v628
    %v709 = vpack.c.bf16 %v708, %v708
    %710 = vmatprep.subr.bf16.mxu0 %v389
    %711 = vmatpush1.bf16.msra.mxu0 %v388
    %712 = vmatprep.subr.bf16.mxu0 %v391
    %713 = vmatpush1.bf16.msra.mxu0 %v390
    %714 = vmatprep.subr.bf16.mxu0 %v393
    %715 = vmatpush1.bf16.msra.mxu0 %v392
    %716 = vmatprep.subr.bf16.mxu0 %v395
    %717 = vmatpush1.bf16.msra.mxu0 %v394
    %718 = vmatprep.subr.bf16.mxu0 %v397
    %719 = vmatpush1.bf16.msra.mxu0 %v396
    %720 = vmatprep.subr.bf16.mxu0 %v399
    %721 = vmatpush1.bf16.msra.mxu0 %v398
    %722 = vmatprep.subr.bf16.mxu0 %v401
    %723 = vmatpush1.bf16.msra.mxu0 %v400
    %724 = vmatprep.subr.bf16.mxu0 %v403
    %725 = vmatpush1.bf16.msra.mxu0 %v402
    %726 = vmatprep.subr.bf16.mxu0 0
    %727 = vmatpush1.bf16.msra.mxu0 0
    %728 = vmatprep.subr.bf16.mxu0 0
    %729 = vmatpush1.bf16.msra.mxu0 0
    %730 = vmatprep.subr.bf16.mxu0 0
    %731 = vmatpush1.bf16.msra.mxu0 0
    %732 = vmatprep.subr.bf16.mxu0 0
    %733 = vmatpush1.bf16.msra.mxu0 0
    %734 = vmatprep.subr.bf16.mxu0 0
    %735 = vmatpush1.bf16.msra.mxu0 0
    %736 = vmatprep.subr.bf16.mxu0 0
    %737 = vmatpush1.bf16.msra.mxu0 0
    %738 = vmatprep.subr.bf16.mxu0 0
    %739 = vmatpush1.bf16.msra.mxu0 0
    %740 = vmatprep.subr.bf16.mxu0 0
    %741 = vmatpush1.bf16.msra.mxu0 0
    %742 = vmatprep.mubr.bf16.mxu0 0
    %743 = vmatmul.mubr.bf16.gmra.mrb[0].mxu0 %v709
    %v744 = vpop.f32.mrb[0].mxu0
    %v745 = vadd.f32 %v215, %v744
    %v746 = vpop.f32.mrb[0].mxu0
    %v747 = vadd.f32 %v219, %v746
    %v748 = vpop.f32.mrb[0].mxu0
    %v749 = vpop.f32.mrb[0].mxu0
    %750 = vdwg.mxu0
    %v751 = vxor.u32 %v745, 2147483648
    %v752 = vxor.u32 %v747, 2147483648
    %v753 = vmul.f32 %v751, 1.442695
    %v754 = vpow.pop %v753
    %v755 = vmul.f32 %v752, 1.442695
    %v756 = vpow.pop %v755
    %v757 = vadd.f32 %v754, 1.0
    %v758 = vadd.f32 %v756, 1.0
    %v759 = vrcp.pop %v757
    %v760 = vmul.f32 1.0, %v759
    %v761 = vrcp.pop %v758
    %v762 = vmul.f32 1.0, %v761
    %v763 = vmul.f32 %v762, 2.0
    %v764 = vsub.f32 %v763, 1.0
    %v765 = vmul.f32 %v760, %v626
    %v766 = vmul.f32 %v760, %v764
    %768 = vrot.lane.b32.xlu0 %v766, 64
    %v769 = vpop.permute.xlu0 %768
    %v771 = vadd.f32 %v765, %v769
    %v772 = vtanh.pop %v771
    %v773 = vmul.f32 %v762, %v772
    %v774 = vld [vmem:[#allocation2 + $0x30] sm:$0xff]
    %v775 = vld [vmem:[#allocation2 + $0x38] sm:$0xff]
    %v776 = vpack.c.bf16 %v703, %v703
    %778 = vrot.lane.b32.xlu0 %v776, 64
    %v779 = vpop.permute.xlu0 %778
    %v781 = vsel %vm264, %v779, 0
    %783 = vmatprep.subr.bf16.mxu0 %v249
    %784 = vmatpush1.bf16.msra.mxu0 %v248
    %785 = vmatprep.subr.bf16.mxu0 %v251
    %786 = vmatpush1.bf16.msra.mxu0 %v250
    %787 = vmatprep.subr.bf16.mxu0 %v253
    %788 = vmatpush1.bf16.msra.mxu0 %v252
    %789 = vmatprep.subr.bf16.mxu0 %v255
    %790 = vmatpush1.bf16.msra.mxu0 %v254
    %791 = vmatprep.subr.bf16.mxu0 0
    %792 = vmatpush1.bf16.msra.mxu0 0
    %793 = vmatprep.subr.bf16.mxu0 0
    %794 = vmatpush1.bf16.msra.mxu0 0
    %795 = vmatprep.subr.bf16.mxu0 0
    %796 = vmatpush1.bf16.msra.mxu0 0
    %797 = vmatprep.subr.bf16.mxu0 0
    %798 = vmatpush1.bf16.msra.mxu0 0
    %799 = vmatprep.subr.bf16.mxu0 0
    %800 = vmatpush1.bf16.msra.mxu0 0
    %801 = vmatprep.subr.bf16.mxu0 0
    %802 = vmatpush1.bf16.msra.mxu0 0
    %803 = vmatprep.subr.bf16.mxu0 0
    %804 = vmatpush1.bf16.msra.mxu0 0
    %805 = vmatprep.subr.bf16.mxu0 0
    %806 = vmatpush1.bf16.msra.mxu0 0
    %807 = vmatprep.subr.bf16.mxu0 0
    %808 = vmatpush1.bf16.msra.mxu0 0
    %809 = vmatprep.subr.bf16.mxu0 0
    %810 = vmatpush1.bf16.msra.mxu0 0
    %811 = vmatprep.subr.bf16.mxu0 0
    %812 = vmatpush1.bf16.msra.mxu0 0
    %813 = vmatprep.subr.bf16.mxu0 0
    %814 = vmatpush1.bf16.msra.mxu0 0
    %815 = vmatprep.mubr.bf16.mxu0 0
    %816 = vmatmul.mubr.bf16.gmra.mrb[0].mxu0 %v781
    %v817 = vpop.f32.mrb[0].mxu0
    %v818 = vadd.f32 0.0, %v817
    %v819 = vpop.f32.mrb[0].mxu0
    %v820 = vadd.f32 0.0, %v819
    %v821 = vpop.f32.mrb[0].mxu0
    %v822 = vpop.f32.mrb[0].mxu0
    %823 = vdwg.mxu0
    %v824 = vadd.f32 %v774, %v818
    %v825 = vadd.f32 %v775, %v820
    %v826 = vxor.u32 %v824, 2147483648
    %v827 = vxor.u32 %v825, 2147483648
    %v828 = vmul.f32 %v826, 1.442695
    %v829 = vpow.pop %v828
    %v830 = vmul.f32 %v827, 1.442695
    %v831 = vpow.pop %v830
    %v832 = vadd.f32 %v829, 1.0
    %v833 = vadd.f32 %v831, 1.0
    %v834 = vrcp.pop %v832
    %v835 = vmul.f32 1.0, %v834
    %v836 = vrcp.pop %v833
    %v837 = vmul.f32 1.0, %v836
    %v838 = vmul.f32 %v837, 2.0
    %v839 = vsub.f32 %v838, 1.0
    %v840 = vmul.f32 %v835, %v701
    %v841 = vmul.f32 %v835, %v839
    %843 = vrot.lane.b32.xlu0 %v841, 64
    %v844 = vpop.permute.xlu0 %843
    %v846 = vadd.f32 %v840, %v844
    %v847 = vtanh.pop %v846
    %v848 = vmul.f32 %v837, %v847
    %850 = vrot.lane.b32.xlu0 %v848, 64
    %v851 = vpop.permute.xlu0 %850
    %v853 = vsel %vm264, %v851, %v773
    %v854 = vpack.c.bf16 %v853, %v853
    %855 = vmatprep.subr.bf16.mxu0 %v389
    %856 = vmatpush1.bf16.msra.mxu0 %v388
    %857 = vmatprep.subr.bf16.mxu0 %v391
    %858 = vmatpush1.bf16.msra.mxu0 %v390
    %859 = vmatprep.subr.bf16.mxu0 %v393
    %860 = vmatpush1.bf16.msra.mxu0 %v392
    %861 = vmatprep.subr.bf16.mxu0 %v395
    %862 = vmatpush1.bf16.msra.mxu0 %v394
    %863 = vmatprep.subr.bf16.mxu0 %v397
    %864 = vmatpush1.bf16.msra.mxu0 %v396
    %865 = vmatprep.subr.bf16.mxu0 %v399
    %866 = vmatpush1.bf16.msra.mxu0 %v398
    %867 = vmatprep.subr.bf16.mxu0 %v401
    %868 = vmatpush1.bf16.msra.mxu0 %v400
    %869 = vmatprep.subr.bf16.mxu0 %v403
    %870 = vmatpush1.bf16.msra.mxu0 %v402
    %871 = vmatprep.subr.bf16.mxu0 0
    %872 = vmatpush1.bf16.msra.mxu0 0
    %873 = vmatprep.subr.bf16.mxu0 0
    %874 = vmatpush1.bf16.msra.mxu0 0
    %875 = vmatprep.subr.bf16.mxu0 0
    %876 = vmatpush1.bf16.msra.mxu0 0
    %877 = vmatprep.subr.bf16.mxu0 0
    %878 = vmatpush1.bf16.msra.mxu0 0
    %879 = vmatprep.subr.bf16.mxu0 0
    %880 = vmatpush1.bf16.msra.mxu0 0
    %881 = vmatprep.subr.bf16.mxu0 0
    %882 = vmatpush1.bf16.msra.mxu0 0
    %883 = vmatprep.subr.bf16.mxu0 0
    %884 = vmatpush1.bf16.msra.mxu0 0
    %885 = vmatprep.subr.bf16.mxu0 0
    %886 = vmatpush1.bf16.msra.mxu0 0
    %887 = vmatprep.mubr.bf16.mxu0 0
    %888 = vmatmul.mubr.bf16.gmra.mrb[0].mxu0 %v854
    %v889 = vpop.f32.mrb[0].mxu0
    %v890 = vadd.f32 %v215, %v889
    %v891 = vpop.f32.mrb[0].mxu0
    %v892 = vadd.f32 %v219, %v891
    %v893 = vpop.f32.mrb[0].mxu0
    %v894 = vpop.f32.mrb[0].mxu0
    %895 = vdwg.mxu0
    %v896 = vxor.u32 %v890, 2147483648
    %v897 = vxor.u32 %v892, 2147483648
    %v898 = vmul.f32 %v896, 1.442695
    %v899 = vpow.pop %v898
    %v900 = vmul.f32 %v897, 1.442695
    %v901 = vpow.pop %v900
    %v902 = vadd.f32 %v899, 1.0
    %v903 = vadd.f32 %v901, 1.0
    %v904 = vrcp.pop %v902
    %v905 = vmul.f32 1.0, %v904
    %v906 = vrcp.pop %v903
    %v907 = vmul.f32 1.0, %v906
    %v908 = vmul.f32 %v907, 2.0
    %v909 = vsub.f32 %v908, 1.0
    %v910 = vmul.f32 %v905, %v771
    %v911 = vmul.f32 %v905, %v909
    %913 = vrot.lane.b32.xlu0 %v911, 64
    %v914 = vpop.permute.xlu0 %913
    %v916 = vadd.f32 %v910, %v914
    %v917 = vtanh.pop %v916
    %v918 = vmul.f32 %v907, %v917
    %v919 = vld [vmem:[#allocation2 + $0x40] sm:$0xff]
    %v920 = vld [vmem:[#allocation2 + $0x48] sm:$0xff]
    %v921 = vpack.c.bf16 %v848, %v848
    %923 = vrot.lane.b32.xlu0 %v921, 64
    %v924 = vpop.permute.xlu0 %923
    %v926 = vsel %vm264, %v924, 0
    %928 = vmatprep.subr.bf16.mxu0 %v249
    %929 = vmatpush1.bf16.msra.mxu0 %v248
    %930 = vmatprep.subr.bf16.mxu0 %v251
    %931 = vmatpush1.bf16.msra.mxu0 %v250
    %932 = vmatprep.subr.bf16.mxu0 %v253
    %933 = vmatpush1.bf16.msra.mxu0 %v252
    %934 = vmatprep.subr.bf16.mxu0 %v255
    %935 = vmatpush1.bf16.msra.mxu0 %v254
    %936 = vmatprep.subr.bf16.mxu0 0
    %937 = vmatpush1.bf16.msra.mxu0 0
    %938 = vmatprep.subr.bf16.mxu0 0
    %939 = vmatpush1.bf16.msra.mxu0 0
    %940 = vmatprep.subr.bf16.mxu0 0
    %941 = vmatpush1.bf16.msra.mxu0 0
    %942 = vmatprep.subr.bf16.mxu0 0
    %943 = vmatpush1.bf16.msra.mxu0 0
    %944 = vmatprep.subr.bf16.mxu0 0
    %945 = vmatpush1.bf16.msra.mxu0 0
    %946 = vmatprep.subr.bf16.mxu0 0
    %947 = vmatpush1.bf16.msra.mxu0 0
    %948 = vmatprep.subr.bf16.mxu0 0
    %949 = vmatpush1.bf16.msra.mxu0 0
    %950 = vmatprep.subr.bf16.mxu0 0
    %951 = vmatpush1.bf16.msra.mxu0 0
    %952 = vmatprep.subr.bf16.mxu0 0
    %953 = vmatpush1.bf16.msra.mxu0 0
    %954 = vmatprep.subr.bf16.mxu0 0
    %955 = vmatpush1.bf16.msra.mxu0 0
    %956 = vmatprep.subr.bf16.mxu0 0
    %957 = vmatpush1.bf16.msra.mxu0 0
    %958 = vmatprep.subr.bf16.mxu0 0
    %959 = vmatpush1.bf16.msra.mxu0 0
    %960 = vmatprep.mubr.bf16.mxu0 0
    %961 = vmatmul.mubr.bf16.gmra.mrb[0].mxu0 %v926
    %v962 = vpop.f32.mrb[0].mxu0
    %v963 = vadd.f32 0.0, %v962
    %v964 = vpop.f32.mrb[0].mxu0
    %v965 = vadd.f32 0.0, %v964
    %v966 = vpop.f32.mrb[0].mxu0
    %v967 = vpop.f32.mrb[0].mxu0
    %968 = vdwg.mxu0
    %v969 = vadd.f32 %v919, %v963
    %v970 = vadd.f32 %v920, %v965
    %v971 = vxor.u32 %v969, 2147483648
    %v972 = vxor.u32 %v970, 2147483648
    %v973 = vmul.f32 %v971, 1.442695
    %v974 = vpow.pop %v973
    %v975 = vmul.f32 %v972, 1.442695
    %v976 = vpow.pop %v975
    %v977 = vadd.f32 %v974, 1.0
    %v978 = vadd.f32 %v976, 1.0
    %v979 = vrcp.pop %v977
    %v980 = vmul.f32 1.0, %v979
    %v981 = vrcp.pop %v978
    %v982 = vmul.f32 1.0, %v981
    %v983 = vmul.f32 %v982, 2.0
    %v984 = vsub.f32 %v983, 1.0
    %v985 = vmul.f32 %v980, %v846
    %v986 = vmul.f32 %v980, %v984
    %988 = vrot.lane.b32.xlu0 %v986, 64
    %v989 = vpop.permute.xlu0 %988
    %v991 = vadd.f32 %v985, %v989
    %v992 = vtanh.pop %v991
    %v993 = vmul.f32 %v982, %v992
    %995 = vrot.lane.b32.xlu0 %v993, 64
    %v996 = vpop.permute.xlu0 %995
    %v998 = vsel %vm264, %v996, %v918
    %v999 = vpack.c.bf16 %v998, %v998
    %1000 = vmatprep.subr.bf16.mxu0 %v389
    %1001 = vmatpush1.bf16.msra.mxu0 %v388
    %1002 = vmatprep.subr.bf16.mxu0 %v391
    %1003 = vmatpush1.bf16.msra.mxu0 %v390
    %1004 = vmatprep.subr.bf16.mxu0 %v393
    %1005 = vmatpush1.bf16.msra.mxu0 %v392
    %1006 = vmatprep.subr.bf16.mxu0 %v395
    %1007 = vmatpush1.bf16.msra.mxu0 %v394
    %1008 = vmatprep.subr.bf16.mxu0 %v397
    %1009 = vmatpush1.bf16.msra.mxu0 %v396
    %1010 = vmatprep.subr.bf16.mxu0 %v399
    %1011 = vmatpush1.bf16.msra.mxu0 %v398
    %1012 = vmatprep.subr.bf16.mxu0 %v401
    %1013 = vmatpush1.bf16.msra.mxu0 %v400
    %1014 = vmatprep.subr.bf16.mxu0 %v403
    %1015 = vmatpush1.bf16.msra.mxu0 %v402
    %1016 = vmatprep.subr.bf16.mxu0 0
    %1017 = vmatpush1.bf16.msra.mxu0 0
    %1018 = vmatprep.subr.bf16.mxu0 0
    %1019 = vmatpush1.bf16.msra.mxu0 0
    %1020 = vmatprep.subr.bf16.mxu0 0
    %1021 = vmatpush1.bf16.msra.mxu0 0
    %1022 = vmatprep.subr.bf16.mxu0 0
    %1023 = vmatpush1.bf16.msra.mxu0 0
    %1024 = vmatprep.subr.bf16.mxu0 0
    %1025 = vmatpush1.bf16.msra.mxu0 0
    %1026 = vmatprep.subr.bf16.mxu0 0
    %1027 = vmatpush1.bf16.msra.mxu0 0
    %1028 = vmatprep.subr.bf16.mxu0 0
    %1029 = vmatpush1.bf16.msra.mxu0 0
    %1030 = vmatprep.subr.bf16.mxu0 0
    %1031 = vmatpush1.bf16.msra.mxu0 0
    %1032 = vmatprep.mubr.bf16.mxu0 0
    %1033 = vmatmul.mubr.bf16.gmra.mrb[0].mxu0 %v999
    %v1034 = vpop.f32.mrb[0].mxu0
    %v1035 = vadd.f32 %v215, %v1034
    %v1036 = vpop.f32.mrb[0].mxu0
    %v1037 = vadd.f32 %v219, %v1036
    %v1038 = vpop.f32.mrb[0].mxu0
    %v1039 = vpop.f32.mrb[0].mxu0
    %1040 = vdwg.mxu0
    %v1041 = vxor.u32 %v1035, 2147483648
    %v1042 = vxor.u32 %v1037, 2147483648
    %v1043 = vmul.f32 %v1041, 1.442695
    %v1044 = vpow.pop %v1043
    %v1045 = vmul.f32 %v1042, 1.442695
    %v1046 = vpow.pop %v1045
    %v1047 = vadd.f32 %v1044, 1.0
    %v1048 = vadd.f32 %v1046, 1.0
    %v1049 = vrcp.pop %v1047
    %v1050 = vmul.f32 1.0, %v1049
    %v1051 = vrcp.pop %v1048
    %v1052 = vmul.f32 1.0, %v1051
    %v1053 = vmul.f32 %v1052, 2.0
    %v1054 = vsub.f32 %v1053, 1.0
    %v1055 = vmul.f32 %v1050, %v916
    %v1056 = vmul.f32 %v1050, %v1054
    %1058 = vrot.lane.b32.xlu0 %v1056, 64
    %v1059 = vpop.permute.xlu0 %1058
    %v1061 = vadd.f32 %v1055, %v1059
    %v1062 = vtanh.pop %v1061
    %v1063 = vmul.f32 %v1052, %v1062
    %v1064 = vld [vmem:[#allocation2 + $0x50] sm:$0xff]
    %v1065 = vld [vmem:[#allocation2 + $0x58] sm:$0xff]
    %v1066 = vpack.c.bf16 %v993, %v993
    %1068 = vrot.lane.b32.xlu0 %v1066, 64
    %v1069 = vpop.permute.xlu0 %1068
    %v1071 = vsel %vm264, %v1069, 0
    %1073 = vmatprep.subr.bf16.mxu0 %v249
    %1074 = vmatpush1.bf16.msra.mxu0 %v248
    %1075 = vmatprep.subr.bf16.mxu0 %v251
    %1076 = vmatpush1.bf16.msra.mxu0 %v250
    %1077 = vmatprep.subr.bf16.mxu0 %v253
    %1078 = vmatpush1.bf16.msra.mxu0 %v252
    %1079 = vmatprep.subr.bf16.mxu0 %v255
    %1080 = vmatpush1.bf16.msra.mxu0 %v254
    %1081 = vmatprep.subr.bf16.mxu0 0
    %1082 = vmatpush1.bf16.msra.mxu0 0
    %1083 = vmatprep.subr.bf16.mxu0 0
    %1084 = vmatpush1.bf16.msra.mxu0 0
    %1085 = vmatprep.subr.bf16.mxu0 0
    %1086 = vmatpush1.bf16.msra.mxu0 0
    %1087 = vmatprep.subr.bf16.mxu0 0
    %1088 = vmatpush1.bf16.msra.mxu0 0
    %1089 = vmatprep.subr.bf16.mxu0 0
    %1090 = vmatpush1.bf16.msra.mxu0 0
    %1091 = vmatprep.subr.bf16.mxu0 0
    %1092 = vmatpush1.bf16.msra.mxu0 0
    %1093 = vmatprep.subr.bf16.mxu0 0
    %1094 = vmatpush1.bf16.msra.mxu0 0
    %1095 = vmatprep.subr.bf16.mxu0 0
    %1096 = vmatpush1.bf16.msra.mxu0 0
    %1097 = vmatprep.subr.bf16.mxu0 0
    %1098 = vmatpush1.bf16.msra.mxu0 0
    %1099 = vmatprep.subr.bf16.mxu0 0
    %1100 = vmatpush1.bf16.msra.mxu0 0
    %1101 = vmatprep.subr.bf16.mxu0 0
    %1102 = vmatpush1.bf16.msra.mxu0 0
    %1103 = vmatprep.subr.bf16.mxu0 0
    %1104 = vmatpush1.bf16.msra.mxu0 0
    %1105 = vmatprep.mubr.bf16.mxu0 0
    %1106 = vmatmul.mubr.bf16.gmra.mrb[0].mxu0 %v1071
    %v1107 = vpop.f32.mrb[0].mxu0
    %v1108 = vadd.f32 0.0, %v1107
    %v1109 = vpop.f32.mrb[0].mxu0
    %v1110 = vadd.f32 0.0, %v1109
    %v1111 = vpop.f32.mrb[0].mxu0
    %v1112 = vpop.f32.mrb[0].mxu0
    %1113 = vdwg.mxu0
    %v1114 = vadd.f32 %v1064, %v1108
    %v1115 = vadd.f32 %v1065, %v1110
    %v1116 = vxor.u32 %v1114, 2147483648
    %v1117 = vxor.u32 %v1115, 2147483648
    %v1118 = vmul.f32 %v1116, 1.442695
    %v1119 = vpow.pop %v1118
    %v1120 = vmul.f32 %v1117, 1.442695
    %v1121 = vpow.pop %v1120
    %v1122 = vadd.f32 %v1119, 1.0
    %v1123 = vadd.f32 %v1121, 1.0
    %v1124 = vrcp.pop %v1122
    %v1125 = vmul.f32 1.0, %v1124
    %v1126 = vrcp.pop %v1123
    %v1127 = vmul.f32 1.0, %v1126
    %v1128 = vmul.f32 %v1127, 2.0
    %v1129 = vsub.f32 %v1128, 1.0
    %v1130 = vmul.f32 %v1125, %v991
    %v1131 = vmul.f32 %v1125, %v1129
    %1133 = vrot.lane.b32.xlu0 %v1131, 64
    %v1134 = vpop.permute.xlu0 %1133
    %v1136 = vadd.f32 %v1130, %v1134
    %v1137 = vtanh.pop %v1136
    %v1138 = vmul.f32 %v1127, %v1137
    %1140 = vrot.lane.b32.xlu0 %v1138, 64
    %v1141 = vpop.permute.xlu0 %1140
    %v1143 = vsel %vm264, %v1141, %v1063
    %v1144 = vpack.c.bf16 %v1143, %v1143
    %1145 = vmatprep.subr.bf16.mxu0 %v389
    %1146 = vmatpush1.bf16.msra.mxu0 %v388
    %1147 = vmatprep.subr.bf16.mxu0 %v391
    %1148 = vmatpush1.bf16.msra.mxu0 %v390
    %1149 = vmatprep.subr.bf16.mxu0 %v393
    %1150 = vmatpush1.bf16.msra.mxu0 %v392
    %1151 = vmatprep.subr.bf16.mxu0 %v395
    %1152 = vmatpush1.bf16.msra.mxu0 %v394
    %1153 = vmatprep.subr.bf16.mxu0 %v397
    %1154 = vmatpush1.bf16.msra.mxu0 %v396
    %1155 = vmatprep.subr.bf16.mxu0 %v399
    %1156 = vmatpush1.bf16.msra.mxu0 %v398
    %1157 = vmatprep.subr.bf16.mxu0 %v401
    %1158 = vmatpush1.bf16.msra.mxu0 %v400
    %1159 = vmatprep.subr.bf16.mxu0 %v403
    %1160 = vmatpush1.bf16.msra.mxu0 %v402
    %1161 = vmatprep.subr.bf16.mxu0 0
    %1162 = vmatpush1.bf16.msra.mxu0 0
    %1163 = vmatprep.subr.bf16.mxu0 0
    %1164 = vmatpush1.bf16.msra.mxu0 0
    %1165 = vmatprep.subr.bf16.mxu0 0
    %1166 = vmatpush1.bf16.msra.mxu0 0
    %1167 = vmatprep.subr.bf16.mxu0 0
    %1168 = vmatpush1.bf16.msra.mxu0 0
    %1169 = vmatprep.subr.bf16.mxu0 0
    %1170 = vmatpush1.bf16.msra.mxu0 0
    %1171 = vmatprep.subr.bf16.mxu0 0
    %1172 = vmatpush1.bf16.msra.mxu0 0
    %1173 = vmatprep.subr.bf16.mxu0 0
    %1174 = vmatpush1.bf16.msra.mxu0 0
    %1175 = vmatprep.subr.bf16.mxu0 0
    %1176 = vmatpush1.bf16.msra.mxu0 0
    %1177 = vmatprep.mubr.bf16.mxu0 0
    %1178 = vmatmul.mubr.bf16.gmra.mrb[0].mxu0 %v1144
    %v1179 = vpop.f32.mrb[0].mxu0
    %v1180 = vadd.f32 %v215, %v1179
    %v1181 = vpop.f32.mrb[0].mxu0
    %v1182 = vadd.f32 %v219, %v1181
    %v1183 = vpop.f32.mrb[0].mxu0
    %v1184 = vpop.f32.mrb[0].mxu0
    %1185 = vdwg.mxu0
    %v1186 = vxor.u32 %v1180, 2147483648
    %v1187 = vxor.u32 %v1182, 2147483648
    %v1188 = vmul.f32 %v1186, 1.442695
    %v1189 = vpow.pop %v1188
    %v1190 = vmul.f32 %v1187, 1.442695
    %v1191 = vpow.pop %v1190
    %v1192 = vadd.f32 %v1189, 1.0
    %v1193 = vadd.f32 %v1191, 1.0
    %v1194 = vrcp.pop %v1192
    %v1195 = vmul.f32 1.0, %v1194
    %v1196 = vrcp.pop %v1193
    %v1197 = vmul.f32 1.0, %v1196
    %v1198 = vmul.f32 %v1197, 2.0
    %v1199 = vsub.f32 %v1198, 1.0
    %v1200 = vmul.f32 %v1195, %v1061
    %v1201 = vmul.f32 %v1195, %v1199
    %1203 = vrot.lane.b32.xlu0 %v1201, 64
    %v1204 = vpop.permute.xlu0 %1203
    %v1206 = vadd.f32 %v1200, %v1204
    %v1207 = vtanh.pop %v1206
    %v1208 = vmul.f32 %v1197, %v1207
    %v1209 = vld [vmem:[#allocation2 + $0x60] sm:$0xff]
    %v1210 = vld [vmem:[#allocation2 + $0x68] sm:$0xff]
    %v1211 = vpack.c.bf16 %v1138, %v1138
    %1213 = vrot.lane.b32.xlu0 %v1211, 64
    %v1214 = vpop.permute.xlu0 %1213
    %v1216 = vsel %vm264, %v1214, 0
    %1218 = vmatprep.subr.bf16.mxu0 %v249
    %1219 = vmatpush1.bf16.msra.mxu0 %v248
    %1220 = vmatprep.subr.bf16.mxu0 %v251
    %1221 = vmatpush1.bf16.msra.mxu0 %v250
    %1222 = vmatprep.subr.bf16.mxu0 %v253
    %1223 = vmatpush1.bf16.msra.mxu0 %v252
    %1224 = vmatprep.subr.bf16.mxu0 %v255
    %1225 = vmatpush1.bf16.msra.mxu0 %v254
    %1226 = vmatprep.subr.bf16.mxu0 0
    %1227 = vmatpush1.bf16.msra.mxu0 0
    %1228 = vmatprep.subr.bf16.mxu0 0
    %1229 = vmatpush1.bf16.msra.mxu0 0
    %1230 = vmatprep.subr.bf16.mxu0 0
    %1231 = vmatpush1.bf16.msra.mxu0 0
    %1232 = vmatprep.subr.bf16.mxu0 0
    %1233 = vmatpush1.bf16.msra.mxu0 0
    %1234 = vmatprep.subr.bf16.mxu0 0
    %1235 = vmatpush1.bf16.msra.mxu0 0
    %1236 = vmatprep.subr.bf16.mxu0 0
    %1237 = vmatpush1.bf16.msra.mxu0 0
    %1238 = vmatprep.subr.bf16.mxu0 0
    %1239 = vmatpush1.bf16.msra.mxu0 0
    %1240 = vmatprep.subr.bf16.mxu0 0
    %1241 = vmatpush1.bf16.msra.mxu0 0
    %1242 = vmatprep.subr.bf16.mxu0 0
    %1243 = vmatpush1.bf16.msra.mxu0 0
    %1244 = vmatprep.subr.bf16.mxu0 0
    %1245 = vmatpush1.bf16.msra.mxu0 0
    %1246 = vmatprep.subr.bf16.mxu0 0
    %1247 = vmatpush1.bf16.msra.mxu0 0
    %1248 = vmatprep.subr.bf16.mxu0 0
    %1249 = vmatpush1.bf16.msra.mxu0 0
    %1250 = vmatprep.mubr.bf16.mxu0 0
    %1251 = vmatmul.mubr.bf16.gmra.mrb[0].mxu0 %v1216
    %v1252 = vpop.f32.mrb[0].mxu0
    %v1253 = vadd.f32 0.0, %v1252
    %v1254 = vpop.f32.mrb[0].mxu0
    %v1255 = vadd.f32 0.0, %v1254
    %v1256 = vpop.f32.mrb[0].mxu0
    %v1257 = vpop.f32.mrb[0].mxu0
    %1258 = vdwg.mxu0
    %v1259 = vadd.f32 %v1209, %v1253
    %v1260 = vadd.f32 %v1210, %v1255
    %v1261 = vxor.u32 %v1259, 2147483648
    %v1262 = vxor.u32 %v1260, 2147483648
    %v1263 = vmul.f32 %v1261, 1.442695
    %v1264 = vpow.pop %v1263
    %v1265 = vmul.f32 %v1262, 1.442695
    %v1266 = vpow.pop %v1265
    %v1267 = vadd.f32 %v1264, 1.0
    %v1268 = vadd.f32 %v1266, 1.0
    %v1269 = vrcp.pop %v1267
    %v1270 = vmul.f32 1.0, %v1269
    %v1271 = vrcp.pop %v1268
    %v1272 = vmul.f32 1.0, %v1271
    %v1273 = vmul.f32 %v1272, 2.0
    %v1274 = vsub.f32 %v1273, 1.0
    %v1275 = vmul.f32 %v1270, %v1136
    %v1276 = vmul.f32 %v1270, %v1274
    %1278 = vrot.lane.b32.xlu0 %v1276, 64
    %v1279 = vpop.permute.xlu0 %1278
    %v1281 = vadd.f32 %v1275, %v1279
    %v1282 = vtanh.pop %v1281
    %v1283 = vmul.f32 %v1272, %v1282
    %1285 = vrot.lane.b32.xlu0 %v1283, 64
    %v1286 = vpop.permute.xlu0 %1285
    %v1288 = vsel %vm264, %v1286, %v1208
    %v1289 = vpack.c.bf16 %v1288, %v1288
    %1290 = vmatprep.subr.bf16.mxu0 %v389
    %1291 = vmatpush1.bf16.msra.mxu0 %v388
    %1292 = vmatprep.subr.bf16.mxu0 %v391
    %1293 = vmatpush1.bf16.msra.mxu0 %v390
    %1294 = vmatprep.subr.bf16.mxu0 %v393
    %1295 = vmatpush1.bf16.msra.mxu0 %v392
    %1296 = vmatprep.subr.bf16.mxu0 %v395
    %1297 = vmatpush1.bf16.msra.mxu0 %v394
    %1298 = vmatprep.subr.bf16.mxu0 %v397
    %1299 = vmatpush1.bf16.msra.mxu0 %v396
    %1300 = vmatprep.subr.bf16.mxu0 %v399
    %1301 = vmatpush1.bf16.msra.mxu0 %v398
    %1302 = vmatprep.subr.bf16.mxu0 %v401
    %1303 = vmatpush1.bf16.msra.mxu0 %v400
    %1304 = vmatprep.subr.bf16.mxu0 %v403
    %1305 = vmatpush1.bf16.msra.mxu0 %v402
    %1306 = vmatprep.subr.bf16.mxu0 0
    %1307 = vmatpush1.bf16.msra.mxu0 0
    %1308 = vmatprep.subr.bf16.mxu0 0
    %1309 = vmatpush1.bf16.msra.mxu0 0
    %1310 = vmatprep.subr.bf16.mxu0 0
    %1311 = vmatpush1.bf16.msra.mxu0 0
    %1312 = vmatprep.subr.bf16.mxu0 0
    %1313 = vmatpush1.bf16.msra.mxu0 0
    %1314 = vmatprep.subr.bf16.mxu0 0
    %1315 = vmatpush1.bf16.msra.mxu0 0
    %1316 = vmatprep.subr.bf16.mxu0 0
    %1317 = vmatpush1.bf16.msra.mxu0 0
    %1318 = vmatprep.subr.bf16.mxu0 0
    %1319 = vmatpush1.bf16.msra.mxu0 0
    %1320 = vmatprep.subr.bf16.mxu0 0
    %1321 = vmatpush1.bf16.msra.mxu0 0
    %1322 = vmatprep.mubr.bf16.mxu0 0
    %1323 = vmatmul.mubr.bf16.gmra.mrb[0].mxu0 %v1289
    %v1324 = vpop.f32.mrb[0].mxu0
    %v1325 = vadd.f32 %v215, %v1324
    %v1326 = vpop.f32.mrb[0].mxu0
    %v1327 = vadd.f32 %v219, %v1326
    %v1328 = vpop.f32.mrb[0].mxu0
    %v1329 = vpop.f32.mrb[0].mxu0
    %1330 = vdwg.mxu0
    %v1331 = vxor.u32 %v1325, 2147483648
    %v1332 = vxor.u32 %v1327, 2147483648
    %v1333 = vmul.f32 %v1331, 1.442695
    %v1334 = vpow.pop %v1333
    %v1335 = vmul.f32 %v1332, 1.442695
    %v1336 = vpow.pop %v1335
    %v1337 = vadd.f32 %v1334, 1.0
    %v1338 = vadd.f32 %v1336, 1.0
    %v1339 = vrcp.pop %v1337
    %v1340 = vmul.f32 1.0, %v1339
    %v1341 = vrcp.pop %v1338
    %v1342 = vmul.f32 1.0, %v1341
    %v1343 = vmul.f32 %v1342, 2.0
    %v1344 = vsub.f32 %v1343, 1.0
    %v1345 = vmul.f32 %v1340, %v1206
    %v1346 = vmul.f32 %v1340, %v1344
    %1348 = vrot.lane.b32.xlu0 %v1346, 64
    %v1349 = vpop.permute.xlu0 %1348
    %v1351 = vadd.f32 %v1345, %v1349
    %v1352 = vtanh.pop %v1351
    %v1353 = vmul.f32 %v1342, %v1352
    %v1354 = vld [vmem:[#allocation2 + $0x70] sm:$0xff]
    %v1355 = vld [vmem:[#allocation2 + $0x78] sm:$0xff]
    %v1356 = vpack.c.bf16 %v1283, %v1283
    %1358 = vrot.lane.b32.xlu0 %v1356, 64
    %v1359 = vpop.permute.xlu0 %1358
    %v1361 = vsel %vm264, %v1359, 0
    %1363 = vmatprep.subr.bf16.mxu0 %v249
    %1364 = vmatpush1.bf16.msra.mxu0 %v248
    %1365 = vmatprep.subr.bf16.mxu0 %v251
    %1366 = vmatpush1.bf16.msra.mxu0 %v250
    %1367 = vmatprep.subr.bf16.mxu0 %v253
    %1368 = vmatpush1.bf16.msra.mxu0 %v252
    %1369 = vmatprep.subr.bf16.mxu0 %v255
    %1370 = vmatpush1.bf16.msra.mxu0 %v254
    %1371 = vmatprep.subr.bf16.mxu0 0
    %1372 = vmatpush1.bf16.msra.mxu0 0
    %1373 = vmatprep.subr.bf16.mxu0 0
    %1374 = vmatpush1.bf16.msra.mxu0 0
    %1375 = vmatprep.subr.bf16.mxu0 0
    %1376 = vmatpush1.bf16.msra.mxu0 0
    %1377 = vmatprep.subr.bf16.mxu0 0
    %1378 = vmatpush1.bf16.msra.mxu0 0
    %1379 = vmatprep.subr.bf16.mxu0 0
    %1380 = vmatpush1.bf16.msra.mxu0 0
    %1381 = vmatprep.subr.bf16.mxu0 0
    %1382 = vmatpush1.bf16.msra.mxu0 0
    %1383 = vmatprep.subr.bf16.mxu0 0
    %1384 = vmatpush1.bf16.msra.mxu0 0
    %1385 = vmatprep.subr.bf16.mxu0 0
    %1386 = vmatpush1.bf16.msra.mxu0 0
    %1387 = vmatprep.subr.bf16.mxu0 0
    %1388 = vmatpush1.bf16.msra.mxu0 0
    %1389 = vmatprep.subr.bf16.mxu0 0
    %1390 = vmatpush1.bf16.msra.mxu0 0
    %1391 = vmatprep.subr.bf16.mxu0 0
    %1392 = vmatpush1.bf16.msra.mxu0 0
    %1393 = vmatprep.subr.bf16.mxu0 0
    %1394 = vmatpush1.bf16.msra.mxu0 0
    %1395 = vmatprep.mubr.bf16.mxu0 0
    %1396 = vmatmul.mubr.bf16.gmra.mrb[0].mxu0 %v1361
    %v1397 = vpop.f32.mrb[0].mxu0
    %v1398 = vadd.f32 0.0, %v1397
    %v1399 = vpop.f32.mrb[0].mxu0
    %v1400 = vadd.f32 0.0, %v1399
    %v1401 = vpop.f32.mrb[0].mxu0
    %v1402 = vpop.f32.mrb[0].mxu0
    %1403 = vdwg.mxu0
    %v1404 = vadd.f32 %v1354, %v1398
    %v1405 = vadd.f32 %v1355, %v1400
    %v1406 = vxor.u32 %v1404, 2147483648
    %v1407 = vxor.u32 %v1405, 2147483648
    %v1408 = vmul.f32 %v1406, 1.442695
    %v1409 = vpow.pop %v1408
    %v1410 = vmul.f32 %v1407, 1.442695
    %v1411 = vpow.pop %v1410
    %v1412 = vadd.f32 %v1409, 1.0
    %v1413 = vadd.f32 %v1411, 1.0
    %v1414 = vrcp.pop %v1412
    %v1415 = vmul.f32 1.0, %v1414
    %v1416 = vrcp.pop %v1413
    %v1417 = vmul.f32 1.0, %v1416
    %v1418 = vmul.f32 %v1417, 2.0
    %v1419 = vsub.f32 %v1418, 1.0
    %v1420 = vmul.f32 %v1415, %v1281
    %v1421 = vmul.f32 %v1415, %v1419
    %1423 = vrot.lane.b32.xlu0 %v1421, 64
    %v1424 = vpop.permute.xlu0 %1423
    %v1426 = vadd.f32 %v1420, %v1424
    %v1427 = vtanh.pop %v1426
    %v1428 = vmul.f32 %v1417, %v1427
    %1430 = vrot.lane.b32.xlu0 %v1428, 64
    %v1431 = vpop.permute.xlu0 %1430
    %v1433 = vsel %vm264, %v1431, %v1353
    %v1434 = vpack.c.bf16 %v1433, %v1433
    %1435 = vmatprep.subr.bf16.mxu0 %v389
    %1436 = vmatpush1.bf16.msra.mxu0 %v388
    %1437 = vmatprep.subr.bf16.mxu0 %v391
    %1438 = vmatpush1.bf16.msra.mxu0 %v390
    %1439 = vmatprep.subr.bf16.mxu0 %v393
    %1440 = vmatpush1.bf16.msra.mxu0 %v392
    %1441 = vmatprep.subr.bf16.mxu0 %v395
    %1442 = vmatpush1.bf16.msra.mxu0 %v394
    %1443 = vmatprep.subr.bf16.mxu0 %v397
    %1444 = vmatpush1.bf16.msra.mxu0 %v396
    %1445 = vmatprep.subr.bf16.mxu0 %v399
    %1446 = vmatpush1.bf16.msra.mxu0 %v398
    %1447 = vmatprep.subr.bf16.mxu0 %v401
    %1448 = vmatpush1.bf16.msra.mxu0 %v400
    %1449 = vmatprep.subr.bf16.mxu0 %v403
    %1450 = vmatpush1.bf16.msra.mxu0 %v402
    %1451 = vmatprep.subr.bf16.mxu0 0
    %1452 = vmatpush1.bf16.msra.mxu0 0
    %1453 = vmatprep.subr.bf16.mxu0 0
    %1454 = vmatpush1.bf16.msra.mxu0 0
    %1455 = vmatprep.subr.bf16.mxu0 0
    %1456 = vmatpush1.bf16.msra.mxu0 0
    %1457 = vmatprep.subr.bf16.mxu0 0
    %1458 = vmatpush1.bf16.msra.mxu0 0
    %1459 = vmatprep.subr.bf16.mxu0 0
    %1460 = vmatpush1.bf16.msra.mxu0 0
    %1461 = vmatprep.subr.bf16.mxu0 0
    %1462 = vmatpush1.bf16.msra.mxu0 0
    %1463 = vmatprep.subr.bf16.mxu0 0
    %1464 = vmatpush1.bf16.msra.mxu0 0
    %1465 = vmatprep.subr.bf16.mxu0 0
    %1466 = vmatpush1.bf16.msra.mxu0 0
    %1467 = vmatprep.mubr.bf16.mxu0 0
    %1468 = vmatmul.mubr.bf16.gmra.mrb[0].mxu0 %v1434
    %v1469 = vpop.f32.mrb[0].mxu0
    %v1470 = vadd.f32 %v215, %v1469
    %v1471 = vpop.f32.mrb[0].mxu0
    %v1472 = vadd.f32 %v219, %v1471
    %v1473 = vpop.f32.mrb[0].mxu0
    %v1474 = vpop.f32.mrb[0].mxu0
    %1475 = vdwg.mxu0
    %v1476 = vxor.u32 %v1470, 2147483648
    %v1477 = vxor.u32 %v1472, 2147483648
    %v1478 = vmul.f32 %v1476, 1.442695
    %v1479 = vpow.pop %v1478
    %v1480 = vmul.f32 %v1477, 1.442695
    %v1481 = vpow.pop %v1480
    %v1482 = vadd.f32 %v1479, 1.0
    %v1483 = vadd.f32 %v1481, 1.0
    %v1484 = vrcp.pop %v1482
    %v1485 = vmul.f32 1.0, %v1484
    %v1486 = vrcp.pop %v1483
    %v1487 = vmul.f32 1.0, %v1486
    %v1488 = vmul.f32 %v1487, 2.0
    %v1489 = vsub.f32 %v1488, 1.0
    %v1490 = vmul.f32 %v1485, %v1351
    %v1491 = vmul.f32 %v1485, %v1489
    %1493 = vrot.lane.b32.xlu0 %v1491, 64
    %v1494 = vpop.permute.xlu0 %1493
    %v1496 = vadd.f32 %v1490, %v1494
    %v1497 = vtanh.pop %v1496
    %v1498 = vmul.f32 %v1487, %v1497
    %v1499 = vld [vmem:[%s6] sm:$0x1]
    %v1501 = vlaneseq
    %v1502 = vshrl.u32 %v1501, 7
    %v1503 = vsub.s32 0, %v1502
    %v1504 = vrot.slane %v1499, %v1503
    %1505 = vrot.lane.b32.xlu0 %v1504, 64
    %v1506 = vpop.permute.xlu0 %1505
    %v1508 = vmul.f32 %v1498, %v1506
    %1510 = vrot.lane.b32.xlu0 %v1508, 64
    %v1511 = vpop.permute.xlu0 %1510
    %v1513 = vsel %vm264, %v1511, 0.0
    %1514 = vadd.xlane.f32.xlu0 %v1513
    %v1515 = vpop.xlane.xlu0 %1514
    %v1516 = vld [vmem:[#allocation3] sm:$0x1]
    %v1518 = vlaneseq
    %v1519 = vshrl.u32 %v1518, 7
    %v1520 = vsub.s32 0, %v1519
    %v1521 = vrot.slane %v1516, %v1520
    %v1523 = vadd.f32 %v1515, %v1521
    %v1524 = vxor.u32 %v1523, 2147483648
    %v1525 = vmul.f32 %v1524, 1.442695
    %v1526 = vpow.pop %v1525
    %v1527 = vadd.f32 %v1526, 1.0
    %v1528 = vrcp.pop %v1527
    %v1529 = vmul.f32 1.0, %v1528
    %1531 = vset.pattern.permute.xlu0 0
    %1532 = vperm.xlu0 %1531, %v1529
    %v1533 = vpop.permute.xlu0 %1532
    %1535 = vst [vmem:[#allocation7] sm:$0xff] %v1533
    // Predicated region
    $region38: #{tpu_custom_call.1} parent=1 // pred_check
      _
    $region39: #{tpu_custom_call.1} parent=1 // pred_check_branch
      %1537 = sbr.rel (0) target = $region41
    $region40: #{tpu_custom_call.1} parent=1 // pred_region
      %s1539 = ssub.s32 128, 128
      %1540 = vsyncadd [#allocation6], %s1539
      %s1542 = sshll.u32 [#allocation7], 4
      %s1543 = int_to_ptr.vmem [resolvable:$true] %s1542
      %1545 = dma.vmem_to_hbm [thread:$0]  %s1543, 128, %s8, [#allocation6]
    $region41: #{tpu_custom_call.1} parent=1 // pred_fallthru
      _
    // Predicated region
    $region42: #{tpu_custom_call.1} parent=1 // pred_check
      _
    $region43: #{tpu_custom_call.1} parent=1 // pred_check_branch
      %1547 = sbr.rel (0) target = $region45
    $region44: #{tpu_custom_call.1} parent=1 // pred_region
      %1548 = dma.done [#allocation6], 128
    $region45: #{tpu_custom_call.1} parent=1 // pred_fallthru
      _
    %1549 = vsyncpa [#allocation5], 1
    %1550 = vsyncpa [#allocation6], 1

</llo_original>
